<compile_context>
chip_gen: v7x
topology: tpu7x:2x2x1
jax: 0.10.0
libtpu: 0.0.40
codegen_flags: <defaults>
</compile_context>

<pallas_src>
import functools

import jax
import jax.numpy as jnp
from jax import lax
from jax.experimental import pallas as pl
from jax.experimental.pallas import tpu as pltpu

EPS = 1e-5       # nn.GroupNorm default eps
SIGMA = 1.0      # sigma=1 in Prox_l2T / Prox_l1


def _round_up(x, m):
    return (x + m - 1) // m * m


def normalization_block_kernel(
    xk_ref, f_ref, vec_ref, wts_ref, mask_ref,
    out_ref,
    pad_ref, col_ref,
    *, C, K, H, W, OFF, CI_PAD):
    p = K // 2
    HW = H * W
    KK = K * K
    Lp = pad_ref.shape[1]

    # --- per-step scratch (re)initialisation --------------------------------
    # Guard bands of the padded slab and the im2col scratch must be zero.  They
    # are rewritten every grid step (not pl.when(pid == 0)) so per-core scratch
    # stays valid under megacore sharding of the batch axis; all of these are
    # lane/sublane aligned stores and cost a handful of vregs.
    pad_ref[:, 0:OFF] = jnp.zeros((2 * C, OFF), jnp.float32)
    pad_ref[:, OFF + HW:Lp] = jnp.zeros((2 * C, Lp - OFF - HW), jnp.float32)
    col_ref[...] = jnp.zeros(col_ref.shape, jnp.float32)

    X = xk_ref[0]            # (C, HW)
    Fv = f_ref[0]            # (C, HW)
    vec = vec_ref[...]       # (14C, 1) packed per-channel params
    wts = wts_ref[...]       # (5C, KK*CI_PAD) packed im2col conv weights
    mval = mask_ref[...]     # (K, HW) horizontal wrap masks (row p == all ones)

    g1, b1 = vec[0 * C:1 * C], vec[1 * C:2 * C]
    g2, b2 = vec[2 * C:3 * C], vec[3 * C:4 * C]
    g3, b3 = vec[4 * C:5 * C], vec[5 * C:6 * C]
    g4, b4 = vec[6 * C:8 * C], vec[8 * C:10 * C]
    c1b = vec[10 * C:11 * C]
    c2b = vec[11 * C:13 * C]
    alpha = vec[13 * C:14 * C]

    def gn(x, count):
        # Two-pass GroupNorm(num_groups=1) stats: mean-shifted variance avoids
        # the catastrophic cancellation of E[x^2] - mean^2.
        mean = jnp.sum(x) * (1.0 / count)
        xc = x - mean
        var = jnp.sum(xc * xc) * (1.0 / count)
        return xc * lax.rsqrt(var + EPS)

    def conv(cin, cout, w_row0, bias):
        # 'same' KxK conv as ONE MXU matmul: scatter the KK shifted (wrap-masked)
        # slabs of the padded image into the im2col scratch at aligned row blocks
        # t*CI_PAD, then (cout, KK*CI_PAD) @ (KK*CI_PAD, HW) with f32 accumulate.
        for t in range(KK):
            ky, kx = divmod(t, K)
            start = OFF + (ky - p) * W + (kx - p)
            v = pad_ref[0:cin, start:start + HW]
            if kx != p:
                v = v * mval[kx:kx + 1, :]
            col_ref[t * CI_PAD:t * CI_PAD + cin, :] = v
        acc = jnp.dot(wts[w_row0:w_row0 + cout, :], col_ref[...],
                      preferred_element_type=jnp.float32)
        if bias is not None:
            acc = acc + bias
        return acc

    # GroupNorm statistics of xk are shared between norm1 and norm2 (affines differ).
    xhat = gn(X, float(C * HW))

    # ---------- branch 1: norm1 -> conv1 -> Prox_l2T(., f) -> norm3 -> conv3 ----------
    pad_ref[0:C, OFF:OFF + HW] = xhat * g1 + b1
    o1 = conv(C, C, 0, c1b)
    # TODO(synk): rcp.Prox_l2T source unavailable; using the standard prox of the
    # data term sigma/2 * ||u - f||^2, i.e. (v + sigma*f) / (1 + sigma).
    o1 = (o1 + SIGMA * Fv) * (1.0 / (1.0 + SIGMA))
    pad_ref[0:C, OFF:OFF + HW] = gn(o1, float(C * HW)) * g3 + b3
    o1 = conv(C, C, 3 * C, None)

    # ---------- branch 2: norm2 -> conv2 -> Prox_l1 -> norm4 -> conv4 ----------
    pad_ref[0:C, OFF:OFF + HW] = xhat * g2 + b2
    o2 = conv(C, 2 * C, C, c2b)
    # TODO(synk): rcp.Prox_l1 source unavailable; soft-threshold
    # sign(v)*max(|v|-sigma,0), written as v - clip(v,-sigma,sigma).
    o2 = o2 - jnp.clip(o2, -SIGMA, SIGMA)
    pad_ref[0:2 * C, OFF:OFF + HW] = gn(o2, float(2 * C * HW)) * g4 + b4
    o2 = conv(2 * C, C, 4 * C, None)

    # ---------- combine: out = xk + alpha * (out1 + out2) ----------
    out_ref[0] = X + alpha * (o1 + o2)


def normalization_block(xk, f, params, kernelsize):
    """Pallas implementation of NormalizationBlock.forward((xk, f))."""
    B, C, H, W = xk.shape
    K = kernelsize
    p = K // 2
    HW = H * W
    KK = K * K
    CI_PAD = _round_up(2 * C, 8)              # per-tap im2col row stride (sublane aligned)
    OFF = _round_up(max(p * W + p, 1), 128)   # 128-lane-aligned interior offset in pad slab
    Lp = OFF + HW + OFF

    xk2 = jnp.asarray(xk, jnp.float32).reshape(B, C, HW)
    f2 = jnp.asarray(f, jnp.float32).reshape(B, C, HW)

    # Conv weights as im2col LHS: (cout, KK*CI_PAD), column order (tap, cin),
    # cin axis zero-padded to CI_PAD; packed row-wise into one operand:
    #   rows [0:C]=conv1, [C:3C]=conv2, [3C:4C]=conv3, [4C:5C]=conv4.
    def lhs(w):
        w = jnp.asarray(w, jnp.float32)
        co, ci = w.shape[0], w.shape[1]
        w = jnp.transpose(w, (0, 2, 3, 1))                        # (co, K, K, ci)
        w = jnp.pad(w, ((0, 0), (0, 0), (0, 0), (0, CI_PAD - ci)))
        return w.reshape(co, KK * CI_PAD)

    wts = jnp.concatenate(
        [lhs(params["w1"]), lhs(params["w2"]), lhs(params["w3"]), lhs(params["w4"])],
        axis=0)                                                   # (5C, KK*CI_PAD)

    # All per-channel vectors packed into one (14C, 1) column operand.
    def colv(a):
        return jnp.asarray(a, jnp.float32).reshape(-1, 1)

    vecs = jnp.concatenate(
        [colv(params[k]) for k in
         ("g1", "b1", "g2", "b2", "g3", "b3", "g4", "b4", "c1b", "c2b", "alpha")],
        axis=0)                                                   # (14C, 1)

    # Horizontal wrap masks of the flat row-major layout, one row per kx
    # (center row is all ones); computed once here instead of every grid step.
    col_idx = jnp.arange(HW, dtype=jnp.int32) % W
    masks = jnp.stack(
        [((col_idx + (kx - p) >= 0) & (col_idx + (kx - p) < W)).astype(jnp.float32)
         for kx in range(K)])                                     # (K, HW)

    io_spec = pl.BlockSpec((1, C, HW), lambda b: (b, 0, 0))

    def full_spec(a):
        nd = a.ndim
        return pl.BlockSpec(a.shape, lambda b: (0,) * nd)

    out = pl.pallas_call(
        functools.partial(normalization_block_kernel,
                          C=C, K=K, H=H, W=W, OFF=OFF, CI_PAD=CI_PAD),
        out_shape=jax.ShapeDtypeStruct((B, C, HW), jnp.float32),
        grid=(B,),
        in_specs=[io_spec, io_spec,
                  full_spec(vecs), full_spec(wts), full_spec(masks)],
        out_specs=io_spec,
        scratch_shapes=[pltpu.VMEM((2 * C, Lp), jnp.float32),          # padded image slab
                        pltpu.VMEM((KK * CI_PAD, HW), jnp.float32)],   # im2col scratch
        compiler_params=pltpu.CompilerParams(dimension_semantics=("parallel",)),
    )(xk2, f2, vecs, wts, masks)
    return out.reshape(B, C, H, W), f


# ----------------------------- pure-JAX reference -----------------------------
def _group_norm_ref(x, gamma, beta):
    mu = jnp.mean(x, axis=(1, 2, 3), keepdims=True)
    var = jnp.mean((x - mu) ** 2, axis=(1, 2, 3), keepdims=True)
    return (x - mu) / jnp.sqrt(var + EPS) * gamma[None, :, None, None] + beta[None, :, None, None]


def _conv2d_ref(x, w, b=None):
    K = w.shape[-1]
    p = K // 2
    out = lax.conv_general_dilated(
        x, w, (1, 1), [(p, p), (p, p)],
        dimension_numbers=("NCHW", "OIHW", "NCHW"),
        precision=lax.Precision.HIGHEST)
    if b is not None:
        out = out + b[None, :, None, None]
    return out


def reference_forward(xk, f, params):
    o1 = _group_norm_ref(xk, params["g1"], params["b1"])
    o1 = _conv2d_ref(o1, params["w1"], params["c1b"])
    o1 = (o1 + SIGMA * f) / (1.0 + SIGMA)
    o1 = _group_norm_ref(o1, params["g3"], params["b3"])
    o1 = _conv2d_ref(o1, params["w3"])
    o2 = _group_norm_ref(xk, params["g2"], params["b2"])
    o2 = _conv2d_ref(o2, params["w2"], params["c2b"])
    o2 = jnp.sign(o2) * jnp.maximum(jnp.abs(o2) - SIGMA, 0.0)
    o2 = _group_norm_ref(o2, params["g4"], params["b4"])
    o2 = _conv2d_ref(o2, params["w4"])
    out = xk + params["alpha"].reshape(1, -1, 1, 1) * (o1 + o2)
    return out, f


if __name__ == "__main__":
    kernelsize, C = 3, 4
    B, H, W = 2, 16, 16

    key = jax.random.PRNGKey(0)
    ks = jax.random.split(key, 20)

    def rnd(k, shape, scale=0.2):
        return (scale * jax.random.normal(k, shape)).astype(jnp.float32)

    params = {
        "g1": 1.0 + rnd(ks[0], (C,)), "b1": rnd(ks[1], (C,)),
        "g2": 1.0 + rnd(ks[2], (C,)), "b2": rnd(ks[3], (C,)),
        "g3": 1.0 + rnd(ks[4], (C,)), "b3": rnd(ks[5], (C,)),
        "g4": 1.0 + rnd(ks[6], (2 * C,)), "b4": rnd(ks[7], (2 * C,)),
        "w1": rnd(ks[8], (C, C, kernelsize, kernelsize)),
        "c1b": rnd(ks[9], (C,)),
        "w2": rnd(ks[10], (2 * C, C, kernelsize, kernelsize)),
        "c2b": rnd(ks[11], (2 * C,)),
        "w3": rnd(ks[12], (C, C, kernelsize, kernelsize)),
        "w4": rnd(ks[13], (C, 2 * C, kernelsize, kernelsize)),
        # nn.Parameter(torch.zeros((1,C,1,1))) in __init__; use small random values
        # (deterministic via PRNGKey(0)) so the residual path is actually exercised.
        "alpha": rnd(ks[14], (C,)),
    }

    xk = rnd(ks[15], (B, C, H, W), scale=1.0)
    f = rnd(ks[16], (B, C, H, W), scale=1.0)

    out, f_out = normalization_block(xk, f, params, kernelsize)
    out = jax.block_until_ready(out)

    ref_out, _ = reference_forward(xk, f, params)
    max_err = float(jnp.max(jnp.abs(out - ref_out)))
    assert jnp.allclose(out, ref_out, atol=1e-3, rtol=1e-3), f"max abs err {max_err}"

    print("KERNEL_OK")
</pallas_src>

<mosaic_0001>
module attributes {stable_mosaic.version = 11 : i64} {
  func.func @normalization_block_kernel(%arg0: i32, %arg1: memref<1x4x256xf32, #tpu.memory_space<vmem>>, %arg2: memref<1x4x256xf32, #tpu.memory_space<vmem>>, %arg3: memref<56x1xf32, #tpu.memory_space<vmem>>, %arg4: memref<20x72xf32, #tpu.memory_space<vmem>>, %arg5: memref<3x256xf32, #tpu.memory_space<vmem>>, %arg6: memref<1x4x256xf32, #tpu.memory_space<vmem>>, %arg7: memref<8x512xf32, #tpu.memory_space<vmem>>, %arg8: memref<72x256xf32, #tpu.memory_space<vmem>>) attributes {dimension_semantics = [#tpu.dimension_semantics<parallel>], iteration_bounds = array<i64: 2>, scalar_prefetch = 0 : i64, scratch_operands = 2 : i64, tpu.core_type = #tpu.core_type<tc>, window_params = [{transform_indices = @transform_0, window_bounds = array<i64: 1, 4, 256>}, {transform_indices = @transform_1, window_bounds = array<i64: 1, 4, 256>}, {pipeline_mode = #tpu.pipeline_mode<synchronous>, transform_indices = @transform_2, window_bounds = array<i64: 56, 1>}, {pipeline_mode = #tpu.pipeline_mode<synchronous>, transform_indices = @transform_3, window_bounds = array<i64: 20, 72>}, {pipeline_mode = #tpu.pipeline_mode<synchronous>, transform_indices = @transform_4, window_bounds = array<i64: 3, 256>}, {transform_indices = @transform_5, window_bounds = array<i64: 1, 4, 256>}]} {
    %cst = arith.constant 0.000000e+00 : f32
    %0 = vector.broadcast %cst : f32 to vector<8x128xf32>
    %c0 = arith.constant 0 : index
    %c0_0 = arith.constant 0 : index
    %1 = vector.load %arg7[%c0, %c0_0] : memref<8x512xf32, #tpu.memory_space<vmem>>, vector<8x128xf32>
    tpu.vector_store %arg7[%c0, %c0_0], %0 {strides = array<i32>} : memref<8x512xf32, #tpu.memory_space<vmem>>, vector<8x128xf32>,
    %cst_1 = arith.constant 0.000000e+00 : f32
    %2 = vector.broadcast %cst_1 : f32 to vector<8x128xf32>
    %c0_2 = arith.constant 0 : index
    %c384 = arith.constant 384 : index
    %3 = vector.load %arg7[%c0_2, %c384] : memref<8x512xf32, #tpu.memory_space<vmem>>, vector<8x128xf32>
    tpu.vector_store %arg7[%c0_2, %c384], %2 {strides = array<i32>} : memref<8x512xf32, #tpu.memory_space<vmem>>, vector<8x128xf32>,
    %cst_3 = arith.constant 0.000000e+00 : f32
    %4 = vector.broadcast %cst_3 : f32 to vector<72x256xf32>
    %c0_4 = arith.constant 0 : index
    %c0_5 = arith.constant 0 : index
    %5 = vector.load %arg8[%c0_4, %c0_5] : memref<72x256xf32, #tpu.memory_space<vmem>>, vector<72x256xf32>
    tpu.vector_store %arg8[%c0_4, %c0_5], %4 {strides = array<i32>} : memref<72x256xf32, #tpu.memory_space<vmem>>, vector<72x256xf32>,
    %c0_6 = arith.constant 0 : index
    %c0_7 = arith.constant 0 : index
    %c0_8 = arith.constant 0 : index
    %6 = vector.load %arg1[%c0_6, %c0_7, %c0_8] : memref<1x4x256xf32, #tpu.memory_space<vmem>>, vector<1x4x256xf32>
    %7 = vector.shape_cast %6 : vector<1x4x256xf32> to vector<4x256xf32>
    %c0_9 = arith.constant 0 : index
    %c0_10 = arith.constant 0 : index
    %c0_11 = arith.constant 0 : index
    %8 = vector.load %arg2[%c0_9, %c0_10, %c0_11] : memref<1x4x256xf32, #tpu.memory_space<vmem>>, vector<1x4x256xf32>
    %9 = vector.shape_cast %8 : vector<1x4x256xf32> to vector<4x256xf32>
    %c0_12 = arith.constant 0 : index
    %c0_13 = arith.constant 0 : index
    %10 = vector.load %arg3[%c0_12, %c0_13] : memref<56x1xf32, #tpu.memory_space<vmem>>, vector<56x1xf32>
    %c0_14 = arith.constant 0 : index
    %c0_15 = arith.constant 0 : index
    %11 = vector.load %arg4[%c0_14, %c0_15] : memref<20x72xf32, #tpu.memory_space<vmem>>, vector<20x72xf32>
    %c0_16 = arith.constant 0 : index
    %c0_17 = arith.constant 0 : index
    %12 = vector.load %arg5[%c0_16, %c0_17] : memref<3x256xf32, #tpu.memory_space<vmem>>, vector<3x256xf32>
    %13 = vector.extract_strided_slice %10 {offsets = [0, 0], sizes = [4, 1], strides = [1, 1]} : vector<56x1xf32> to vector<4x1xf32>
    %14 = vector.extract_strided_slice %10 {offsets = [4, 0], sizes = [4, 1], strides = [1, 1]} : vector<56x1xf32> to vector<4x1xf32>
    %15 = vector.extract_strided_slice %10 {offsets = [8, 0], sizes = [4, 1], strides = [1, 1]} : vector<56x1xf32> to vector<4x1xf32>
    %16 = vector.extract_strided_slice %10 {offsets = [12, 0], sizes = [4, 1], strides = [1, 1]} : vector<56x1xf32> to vector<4x1xf32>
    %17 = vector.extract_strided_slice %10 {offsets = [16, 0], sizes = [4, 1], strides = [1, 1]} : vector<56x1xf32> to vector<4x1xf32>
    %18 = vector.extract_strided_slice %10 {offsets = [20, 0], sizes = [4, 1], strides = [1, 1]} : vector<56x1xf32> to vector<4x1xf32>
    %19 = vector.extract_strided_slice %10 {offsets = [24, 0], sizes = [8, 1], strides = [1, 1]} : vector<56x1xf32> to vector<8x1xf32>
    %20 = vector.extract_strided_slice %10 {offsets = [32, 0], sizes = [8, 1], strides = [1, 1]} : vector<56x1xf32> to vector<8x1xf32>
    %21 = vector.extract_strided_slice %10 {offsets = [40, 0], sizes = [4, 1], strides = [1, 1]} : vector<56x1xf32> to vector<4x1xf32>
    %22 = vector.extract_strided_slice %10 {offsets = [44, 0], sizes = [8, 1], strides = [1, 1]} : vector<56x1xf32> to vector<8x1xf32>
    %23 = vector.extract_strided_slice %10 {offsets = [52, 0], sizes = [4, 1], strides = [1, 1]} : vector<56x1xf32> to vector<4x1xf32>
    %24 = vector.shape_cast %7 : vector<4x256xf32> to vector<1x4x256xf32>
    %cst_18 = arith.constant dense<0.000000e+00> : vector<1xf32>
    %25 = vector.multi_reduction <add>, %24, %cst_18 [1, 2] : vector<1x4x256xf32> to vector<1xf32>
    %26 = vector.shape_cast %25 : vector<1xf32> to vector<1x1x1xf32>
    %27 = vector.extract %26[0, 0, 0] : f32 from vector<1x1x1xf32>
    %cst_19 = arith.constant 9.765625E-4 : f32
    %28 = arith.mulf %27, %cst_19 : f32
    %29 = vector.broadcast %28 : f32 to vector<4x256xf32>
    %30 = arith.subf %7, %29 : vector<4x256xf32>
    %31 = arith.mulf %30, %30 : vector<4x256xf32>
    %32 = vector.shape_cast %31 : vector<4x256xf32> to vector<1x4x256xf32>
    %cst_20 = arith.constant dense<0.000000e+00> : vector<1xf32>
    %33 = vector.multi_reduction <add>, %32, %cst_20 [1, 2] : vector<1x4x256xf32> to vector<1xf32>
    %34 = vector.shape_cast %33 : vector<1xf32> to vector<1x1x1xf32>
    %35 = vector.extract %34[0, 0, 0] : f32 from vector<1x1x1xf32>
    %cst_21 = arith.constant 9.765625E-4 : f32
    %36 = arith.mulf %35, %cst_21 : f32
    %cst_22 = arith.constant 9.99999974E-6 : f32
    %37 = arith.addf %36, %cst_22 : f32
    %38 = math.rsqrt %37 : f32
    %39 = vector.broadcast %38 : f32 to vector<4x256xf32>
    %40 = arith.mulf %30, %39 : vector<4x256xf32>
    %41 = vector.broadcast %13 : vector<4x1xf32> to vector<4x256xf32>
    %42 = arith.mulf %40, %41 : vector<4x256xf32>
    %43 = vector.broadcast %14 : vector<4x1xf32> to vector<4x256xf32>
    %44 = arith.addf %42, %43 : vector<4x256xf32>
    %c0_23 = arith.constant 0 : index
    %c128 = arith.constant 128 : index
    %45 = vector.load %arg7[%c0_23, %c128] : memref<8x512xf32, #tpu.memory_space<vmem>>, vector<4x256xf32>
    tpu.vector_store %arg7[%c0_23, %c128], %44 {strides = array<i32>} : memref<8x512xf32, #tpu.memory_space<vmem>>, vector<4x256xf32>,
    %c0_24 = arith.constant 0 : index
    %c111 = arith.constant 111 : index
    %46 = vector.load %arg7[%c0_24, %c111] : memref<8x512xf32, #tpu.memory_space<vmem>>, vector<4x256xf32>
    %47 = vector.extract_strided_slice %12 {offsets = [0, 0], sizes = [1, 256], strides = [1, 1]} : vector<3x256xf32> to vector<1x256xf32>
    %48 = vector.broadcast %47 : vector<1x256xf32> to vector<4x256xf32>
    %49 = arith.mulf %46, %48 : vector<4x256xf32>
    %c0_25 = arith.constant 0 : index
    %c0_26 = arith.constant 0 : index
    %50 = vector.load %arg8[%c0_25, %c0_26] : memref<72x256xf32, #tpu.memory_space<vmem>>, vector<4x256xf32>
    tpu.vector_store %arg8[%c0_25, %c0_26], %49 {strides = array<i32>} : memref<72x256xf32, #tpu.memory_space<vmem>>, vector<4x256xf32>,
    %c0_27 = arith.constant 0 : index
    %c112 = arith.constant 112 : index
    %51 = vector.load %arg7[%c0_27, %c112] : memref<8x512xf32, #tpu.memory_space<vmem>>, vector<4x256xf32>
    %c8 = arith.constant 8 : index
    %c0_28 = arith.constant 0 : index
    %52 = vector.load %arg8[%c8, %c0_28] : memref<72x256xf32, #tpu.memory_space<vmem>>, vector<4x256xf32>
    tpu.vector_store %arg8[%c8, %c0_28], %51 {strides = array<i32>} : memref<72x256xf32, #tpu.memory_space<vmem>>, vector<4x256xf32>,
    %c0_29 = arith.constant 0 : index
    %c113 = arith.constant 113 : index
    %53 = vector.load %arg7[%c0_29, %c113] : memref<8x512xf32, #tpu.memory_space<vmem>>, vector<4x256xf32>
    %54 = vector.extract_strided_slice %12 {offsets = [2, 0], sizes = [1, 256], strides = [1, 1]} : vector<3x256xf32> to vector<1x256xf32>
    %55 = vector.broadcast %54 : vector<1x256xf32> to vector<4x256xf32>
    %56 = arith.mulf %53, %55 : vector<4x256xf32>
    %c16 = arith.constant 16 : index
    %c0_30 = arith.constant 0 : index
    %57 = vector.load %arg8[%c16, %c0_30] : memref<72x256xf32, #tpu.memory_space<vmem>>, vector<4x256xf32>
    tpu.vector_store %arg8[%c16, %c0_30], %56 {strides = array<i32>} : memref<72x256xf32, #tpu.memory_space<vmem>>, vector<4x256xf32>,
    %c0_31 = arith.constant 0 : index
    %c127 = arith.constant 127 : index
    %58 = vector.load %arg7[%c0_31, %c127] : memref<8x512xf32, #tpu.memory_space<vmem>>, vector<4x256xf32>
    %59 = vector.extract_strided_slice %12 {offsets = [0, 0], sizes = [1, 256], strides = [1, 1]} : vector<3x256xf32> to vector<1x256xf32>
    %60 = vector.broadcast %59 : vector<1x256xf32> to vector<4x256xf32>
    %61 = arith.mulf %58, %60 : vector<4x256xf32>
    %c24 = arith.constant 24 : index
    %c0_32 = arith.constant 0 : index
    %62 = vector.load %arg8[%c24, %c0_32] : memref<72x256xf32, #tpu.memory_space<vmem>>, vector<4x256xf32>
    tpu.vector_store %arg8[%c24, %c0_32], %61 {strides = array<i32>} : memref<72x256xf32, #tpu.memory_space<vmem>>, vector<4x256xf32>,
    %c0_33 = arith.constant 0 : index
    %c128_34 = arith.constant 128 : index
    %63 = vector.load %arg7[%c0_33, %c128_34] : memref<8x512xf32, #tpu.memory_space<vmem>>, vector<4x256xf32>
    %c32 = arith.constant 32 : index
    %c0_35 = arith.constant 0 : index
    %64 = vector.load %arg8[%c32, %c0_35] : memref<72x256xf32, #tpu.memory_space<vmem>>, vector<4x256xf32>
    tpu.vector_store %arg8[%c32, %c0_35], %63 {strides = array<i32>} : memref<72x256xf32, #tpu.memory_space<vmem>>, vector<4x256xf32>,
    %c0_36 = arith.constant 0 : index
    %c129 = arith.constant 129 : index
    %65 = vector.load %arg7[%c0_36, %c129] : memref<8x512xf32, #tpu.memory_space<vmem>>, vector<4x256xf32>
    %66 = vector.extract_strided_slice %12 {offsets = [2, 0], sizes = [1, 256], strides = [1, 1]} : vector<3x256xf32> to vector<1x256xf32>
    %67 = vector.broadcast %66 : vector<1x256xf32> to vector<4x256xf32>
    %68 = arith.mulf %65, %67 : vector<4x256xf32>
    %c40 = arith.constant 40 : index
    %c0_37 = arith.constant 0 : index
    %69 = vector.load %arg8[%c40, %c0_37] : memref<72x256xf32, #tpu.memory_space<vmem>>, vector<4x256xf32>
    tpu.vector_store %arg8[%c40, %c0_37], %68 {strides = array<i32>} : memref<72x256xf32, #tpu.memory_space<vmem>>, vector<4x256xf32>,
    %c0_38 = arith.constant 0 : index
    %c143 = arith.constant 143 : index
    %70 = vector.load %arg7[%c0_38, %c143] : memref<8x512xf32, #tpu.memory_space<vmem>>, vector<4x256xf32>
    %71 = vector.extract_strided_slice %12 {offsets = [0, 0], sizes = [1, 256], strides = [1, 1]} : vector<3x256xf32> to vector<1x256xf32>
    %72 = vector.broadcast %71 : vector<1x256xf32> to vector<4x256xf32>
    %73 = arith.mulf %70, %72 : vector<4x256xf32>
    %c48 = arith.constant 48 : index
    %c0_39 = arith.constant 0 : index
    %74 = vector.load %arg8[%c48, %c0_39] : memref<72x256xf32, #tpu.memory_space<vmem>>, vector<4x256xf32>
    tpu.vector_store %arg8[%c48, %c0_39], %73 {strides = array<i32>} : memref<72x256xf32, #tpu.memory_space<vmem>>, vector<4x256xf32>,
    %c0_40 = arith.constant 0 : index
    %c144 = arith.constant 144 : index
    %75 = vector.load %arg7[%c0_40, %c144] : memref<8x512xf32, #tpu.memory_space<vmem>>, vector<4x256xf32>
    %c56 = arith.constant 56 : index
    %c0_41 = arith.constant 0 : index
    %76 = vector.load %arg8[%c56, %c0_41] : memref<72x256xf32, #tpu.memory_space<vmem>>, vector<4x256xf32>
    tpu.vector_store %arg8[%c56, %c0_41], %75 {strides = array<i32>} : memref<72x256xf32, #tpu.memory_space<vmem>>, vector<4x256xf32>,
    %c0_42 = arith.constant 0 : index
    %c145 = arith.constant 145 : index
    %77 = vector.load %arg7[%c0_42, %c145] : memref<8x512xf32, #tpu.memory_space<vmem>>, vector<4x256xf32>
    %78 = vector.extract_strided_slice %12 {offsets = [2, 0], sizes = [1, 256], strides = [1, 1]} : vector<3x256xf32> to vector<1x256xf32>
    %79 = vector.broadcast %78 : vector<1x256xf32> to vector<4x256xf32>
    %80 = arith.mulf %77, %79 : vector<4x256xf32>
    %c64 = arith.constant 64 : index
    %c0_43 = arith.constant 0 : index
    %81 = vector.load %arg8[%c64, %c0_43] : memref<72x256xf32, #tpu.memory_space<vmem>>, vector<4x256xf32>
    tpu.vector_store %arg8[%c64, %c0_43], %80 {strides = array<i32>} : memref<72x256xf32, #tpu.memory_space<vmem>>, vector<4x256xf32>,
    %82 = vector.extract_strided_slice %11 {offsets = [0, 0], sizes = [4, 72], strides = [1, 1]} : vector<20x72xf32> to vector<4x72xf32>
    %c0_44 = arith.constant 0 : index
    %c0_45 = arith.constant 0 : index
    %83 = vector.load %arg8[%c0_44, %c0_45] : memref<72x256xf32, #tpu.memory_space<vmem>>, vector<72x256xf32>
    %cst_46 = arith.constant dense<0.000000e+00> : vector<4x256xf32>
    %84 = tpu.matmul %82, %83, %cst_46 {dimension_numbers = #tpu.dot_dimension_numbers<[1], [0], [0], [1], [0, 0, 1, 1], [], []>} : vector<4x72xf32>, vector<72x256xf32>, vector<4x256xf32> -> vector<4x256xf32>
    %85 = vector.broadcast %21 : vector<4x1xf32> to vector<4x256xf32>
    %86 = arith.addf %84, %85 : vector<4x256xf32>
    %cst_47 = arith.constant 1.000000e+00 : f32
    %87 = vector.broadcast %cst_47 : f32 to vector<4x256xf32>
    %88 = arith.mulf %87, %9 : vector<4x256xf32>
    %89 = arith.addf %86, %88 : vector<4x256xf32>
    %cst_48 = arith.constant 5.000000e-01 : f32
    %90 = vector.broadcast %cst_48 : f32 to vector<4x256xf32>
    %91 = arith.mulf %89, %90 : vector<4x256xf32>
    %92 = vector.shape_cast %91 : vector<4x256xf32> to vector<1x4x256xf32>
    %cst_49 = arith.constant dense<0.000000e+00> : vector<1xf32>
    %93 = vector.multi_reduction <add>, %92, %cst_49 [1, 2] : vector<1x4x256xf32> to vector<1xf32>
    %94 = vector.shape_cast %93 : vector<1xf32> to vector<1x1x1xf32>
    %95 = vector.extract %94[0, 0, 0] : f32 from vector<1x1x1xf32>
    %cst_50 = arith.constant 9.765625E-4 : f32
    %96 = arith.mulf %95, %cst_50 : f32
    %97 = vector.broadcast %96 : f32 to vector<4x256xf32>
    %98 = arith.subf %91, %97 : vector<4x256xf32>
    %99 = arith.mulf %98, %98 : vector<4x256xf32>
    %100 = vector.shape_cast %99 : vector<4x256xf32> to vector<1x4x256xf32>
    %cst_51 = arith.constant dense<0.000000e+00> : vector<1xf32>
    %101 = vector.multi_reduction <add>, %100, %cst_51 [1, 2] : vector<1x4x256xf32> to vector<1xf32>
    %102 = vector.shape_cast %101 : vector<1xf32> to vector<1x1x1xf32>
    %103 = vector.extract %102[0, 0, 0] : f32 from vector<1x1x1xf32>
    %cst_52 = arith.constant 9.765625E-4 : f32
    %104 = arith.mulf %103, %cst_52 : f32
    %cst_53 = arith.constant 9.99999974E-6 : f32
    %105 = arith.addf %104, %cst_53 : f32
    %106 = math.rsqrt %105 : f32
    %107 = vector.broadcast %106 : f32 to vector<4x256xf32>
    %108 = arith.mulf %98, %107 : vector<4x256xf32>
    %109 = vector.broadcast %17 : vector<4x1xf32> to vector<4x256xf32>
    %110 = arith.mulf %108, %109 : vector<4x256xf32>
    %111 = vector.broadcast %18 : vector<4x1xf32> to vector<4x256xf32>
    %112 = arith.addf %110, %111 : vector<4x256xf32>
    %c0_54 = arith.constant 0 : index
    %c128_55 = arith.constant 128 : index
    %113 = vector.load %arg7[%c0_54, %c128_55] : memref<8x512xf32, #tpu.memory_space<vmem>>, vector<4x256xf32>
    tpu.vector_store %arg7[%c0_54, %c128_55], %112 {strides = array<i32>} : memref<8x512xf32, #tpu.memory_space<vmem>>, vector<4x256xf32>,
    %c0_56 = arith.constant 0 : index
    %c111_57 = arith.constant 111 : index
    %114 = vector.load %arg7[%c0_56, %c111_57] : memref<8x512xf32, #tpu.memory_space<vmem>>, vector<4x256xf32>
    %115 = vector.extract_strided_slice %12 {offsets = [0, 0], sizes = [1, 256], strides = [1, 1]} : vector<3x256xf32> to vector<1x256xf32>
    %116 = vector.broadcast %115 : vector<1x256xf32> to vector<4x256xf32>
    %117 = arith.mulf %114, %116 : vector<4x256xf32>
    %c0_58 = arith.constant 0 : index
    %c0_59 = arith.constant 0 : index
    %118 = vector.load %arg8[%c0_58, %c0_59] : memref<72x256xf32, #tpu.memory_space<vmem>>, vector<4x256xf32>
    tpu.vector_store %arg8[%c0_58, %c0_59], %117 {strides = array<i32>} : memref<72x256xf32, #tpu.memory_space<vmem>>, vector<4x256xf32>,
    %c0_60 = arith.constant 0 : index
    %c112_61 = arith.constant 112 : index
    %119 = vector.load %arg7[%c0_60, %c112_61] : memref<8x512xf32, #tpu.memory_space<vmem>>, vector<4x256xf32>
    %c8_62 = arith.constant 8 : index
    %c0_63 = arith.constant 0 : index
    %120 = vector.load %arg8[%c8_62, %c0_63] : memref<72x256xf32, #tpu.memory_space<vmem>>, vector<4x256xf32>
    tpu.vector_store %arg8[%c8_62, %c0_63], %119 {strides = array<i32>} : memref<72x256xf32, #tpu.memory_space<vmem>>, vector<4x256xf32>,
    %c0_64 = arith.constant 0 : index
    %c113_65 = arith.constant 113 : index
    %121 = vector.load %arg7[%c0_64, %c113_65] : memref<8x512xf32, #tpu.memory_space<vmem>>, vector<4x256xf32>
    %122 = vector.extract_strided_slice %12 {offsets = [2, 0], sizes = [1, 256], strides = [1, 1]} : vector<3x256xf32> to vector<1x256xf32>
    %123 = vector.broadcast %122 : vector<1x256xf32> to vector<4x256xf32>
    %124 = arith.mulf %121, %123 : vector<4x256xf32>
    %c16_66 = arith.constant 16 : index
    %c0_67 = arith.constant 0 : index
    %125 = vector.load %arg8[%c16_66, %c0_67] : memref<72x256xf32, #tpu.memory_space<vmem>>, vector<4x256xf32>
    tpu.vector_store %arg8[%c16_66, %c0_67], %124 {strides = array<i32>} : memref<72x256xf32, #tpu.memory_space<vmem>>, vector<4x256xf32>,
    %c0_68 = arith.constant 0 : index
    %c127_69 = arith.constant 127 : index
    %126 = vector.load %arg7[%c0_68, %c127_69] : memref<8x512xf32, #tpu.memory_space<vmem>>, vector<4x256xf32>
    %127 = vector.extract_strided_slice %12 {offsets = [0, 0], sizes = [1, 256], strides = [1, 1]} : vector<3x256xf32> to vector<1x256xf32>
    %128 = vector.broadcast %127 : vector<1x256xf32> to vector<4x256xf32>
    %129 = arith.mulf %126, %128 : vector<4x256xf32>
    %c24_70 = arith.constant 24 : index
    %c0_71 = arith.constant 0 : index
    %130 = vector.load %arg8[%c24_70, %c0_71] : memref<72x256xf32, #tpu.memory_space<vmem>>, vector<4x256xf32>
    tpu.vector_store %arg8[%c24_70, %c0_71], %129 {strides = array<i32>} : memref<72x256xf32, #tpu.memory_space<vmem>>, vector<4x256xf32>,
    %c0_72 = arith.constant 0 : index
    %c128_73 = arith.constant 128 : index
    %131 = vector.load %arg7[%c0_72, %c128_73] : memref<8x512xf32, #tpu.memory_space<vmem>>, vector<4x256xf32>
    %c32_74 = arith.constant 32 : index
    %c0_75 = arith.constant 0 : index
    %132 = vector.load %arg8[%c32_74, %c0_75] : memref<72x256xf32, #tpu.memory_space<vmem>>, vector<4x256xf32>
    tpu.vector_store %arg8[%c32_74, %c0_75], %131 {strides = array<i32>} : memref<72x256xf32, #tpu.memory_space<vmem>>, vector<4x256xf32>,
    %c0_76 = arith.constant 0 : index
    %c129_77 = arith.constant 129 : index
    %133 = vector.load %arg7[%c0_76, %c129_77] : memref<8x512xf32, #tpu.memory_space<vmem>>, vector<4x256xf32>
    %134 = vector.extract_strided_slice %12 {offsets = [2, 0], sizes = [1, 256], strides = [1, 1]} : vector<3x256xf32> to vector<1x256xf32>
    %135 = vector.broadcast %134 : vector<1x256xf32> to vector<4x256xf32>
    %136 = arith.mulf %133, %135 : vector<4x256xf32>
    %c40_78 = arith.constant 40 : index
    %c0_79 = arith.constant 0 : index
    %137 = vector.load %arg8[%c40_78, %c0_79] : memref<72x256xf32, #tpu.memory_space<vmem>>, vector<4x256xf32>
    tpu.vector_store %arg8[%c40_78, %c0_79], %136 {strides = array<i32>} : memref<72x256xf32, #tpu.memory_space<vmem>>, vector<4x256xf32>,
    %c0_80 = arith.constant 0 : index
    %c143_81 = arith.constant 143 : index
    %138 = vector.load %arg7[%c0_80, %c143_81] : memref<8x512xf32, #tpu.memory_space<vmem>>, vector<4x256xf32>
    %139 = vector.extract_strided_slice %12 {offsets = [0, 0], sizes = [1, 256], strides = [1, 1]} : vector<3x256xf32> to vector<1x256xf32>
    %140 = vector.broadcast %139 : vector<1x256xf32> to vector<4x256xf32>
    %141 = arith.mulf %138, %140 : vector<4x256xf32>
    %c48_82 = arith.constant 48 : index
    %c0_83 = arith.constant 0 : index
    %142 = vector.load %arg8[%c48_82, %c0_83] : memref<72x256xf32, #tpu.memory_space<vmem>>, vector<4x256xf32>
    tpu.vector_store %arg8[%c48_82, %c0_83], %141 {strides = array<i32>} : memref<72x256xf32, #tpu.memory_space<vmem>>, vector<4x256xf32>,
    %c0_84 = arith.constant 0 : index
    %c144_85 = arith.constant 144 : index
    %143 = vector.load %arg7[%c0_84, %c144_85] : memref<8x512xf32, #tpu.memory_space<vmem>>, vector<4x256xf32>
    %c56_86 = arith.constant 56 : index
    %c0_87 = arith.constant 0 : index
    %144 = vector.load %arg8[%c56_86, %c0_87] : memref<72x256xf32, #tpu.memory_space<vmem>>, vector<4x256xf32>
    tpu.vector_store %arg8[%c56_86, %c0_87], %143 {strides = array<i32>} : memref<72x256xf32, #tpu.memory_space<vmem>>, vector<4x256xf32>,
    %c0_88 = arith.constant 0 : index
    %c145_89 = arith.constant 145 : index
    %145 = vector.load %arg7[%c0_88, %c145_89] : memref<8x512xf32, #tpu.memory_space<vmem>>, vector<4x256xf32>
    %146 = vector.extract_strided_slice %12 {offsets = [2, 0], sizes = [1, 256], strides = [1, 1]} : vector<3x256xf32> to vector<1x256xf32>
    %147 = vector.broadcast %146 : vector<1x256xf32> to vector<4x256xf32>
    %148 = arith.mulf %145, %147 : vector<4x256xf32>
    %c64_90 = arith.constant 64 : index
    %c0_91 = arith.constant 0 : index
    %149 = vector.load %arg8[%c64_90, %c0_91] : memref<72x256xf32, #tpu.memory_space<vmem>>, vector<4x256xf32>
    tpu.vector_store %arg8[%c64_90, %c0_91], %148 {strides = array<i32>} : memref<72x256xf32, #tpu.memory_space<vmem>>, vector<4x256xf32>,
    %150 = vector.extract_strided_slice %11 {offsets = [12, 0], sizes = [4, 72], strides = [1, 1]} : vector<20x72xf32> to vector<4x72xf32>
    %c0_92 = arith.constant 0 : index
    %c0_93 = arith.constant 0 : index
    %151 = vector.load %arg8[%c0_92, %c0_93] : memref<72x256xf32, #tpu.memory_space<vmem>>, vector<72x256xf32>
    %cst_94 = arith.constant dense<0.000000e+00> : vector<4x256xf32>
    %152 = tpu.matmul %150, %151, %cst_94 {dimension_numbers = #tpu.dot_dimension_numbers<[1], [0], [0], [1], [0, 0, 1, 1], [], []>} : vector<4x72xf32>, vector<72x256xf32>, vector<4x256xf32> -> vector<4x256xf32>
    %153 = vector.broadcast %15 : vector<4x1xf32> to vector<4x256xf32>
    %154 = arith.mulf %40, %153 : vector<4x256xf32>
    %155 = vector.broadcast %16 : vector<4x1xf32> to vector<4x256xf32>
    %156 = arith.addf %154, %155 : vector<4x256xf32>
    %c0_95 = arith.constant 0 : index
    %c128_96 = arith.constant 128 : index
    %157 = vector.load %arg7[%c0_95, %c128_96] : memref<8x512xf32, #tpu.memory_space<vmem>>, vector<4x256xf32>
    tpu.vector_store %arg7[%c0_95, %c128_96], %156 {strides = array<i32>} : memref<8x512xf32, #tpu.memory_space<vmem>>, vector<4x256xf32>,
    %c0_97 = arith.constant 0 : index
    %c111_98 = arith.constant 111 : index
    %158 = vector.load %arg7[%c0_97, %c111_98] : memref<8x512xf32, #tpu.memory_space<vmem>>, vector<4x256xf32>
    %159 = vector.extract_strided_slice %12 {offsets = [0, 0], sizes = [1, 256], strides = [1, 1]} : vector<3x256xf32> to vector<1x256xf32>
    %160 = vector.broadcast %159 : vector<1x256xf32> to vector<4x256xf32>
    %161 = arith.mulf %158, %160 : vector<4x256xf32>
    %c0_99 = arith.constant 0 : index
    %c0_100 = arith.constant 0 : index
    %162 = vector.load %arg8[%c0_99, %c0_100] : memref<72x256xf32, #tpu.memory_space<vmem>>, vector<4x256xf32>
    tpu.vector_store %arg8[%c0_99, %c0_100], %161 {strides = array<i32>} : memref<72x256xf32, #tpu.memory_space<vmem>>, vector<4x256xf32>,
    %c0_101 = arith.constant 0 : index
    %c112_102 = arith.constant 112 : index
    %163 = vector.load %arg7[%c0_101, %c112_102] : memref<8x512xf32, #tpu.memory_space<vmem>>, vector<4x256xf32>
    %c8_103 = arith.constant 8 : index
    %c0_104 = arith.constant 0 : index
    %164 = vector.load %arg8[%c8_103, %c0_104] : memref<72x256xf32, #tpu.memory_space<vmem>>, vector<4x256xf32>
    tpu.vector_store %arg8[%c8_103, %c0_104], %163 {strides = array<i32>} : memref<72x256xf32, #tpu.memory_space<vmem>>, vector<4x256xf32>,
    %c0_105 = arith.constant 0 : index
    %c113_106 = arith.constant 113 : index
    %165 = vector.load %arg7[%c0_105, %c113_106] : memref<8x512xf32, #tpu.memory_space<vmem>>, vector<4x256xf32>
    %166 = vector.extract_strided_slice %12 {offsets = [2, 0], sizes = [1, 256], strides = [1, 1]} : vector<3x256xf32> to vector<1x256xf32>
    %167 = vector.broadcast %166 : vector<1x256xf32> to vector<4x256xf32>
    %168 = arith.mulf %165, %167 : vector<4x256xf32>
    %c16_107 = arith.constant 16 : index
    %c0_108 = arith.constant 0 : index
    %169 = vector.load %arg8[%c16_107, %c0_108] : memref<72x256xf32, #tpu.memory_space<vmem>>, vector<4x256xf32>
    tpu.vector_store %arg8[%c16_107, %c0_108], %168 {strides = array<i32>} : memref<72x256xf32, #tpu.memory_space<vmem>>, vector<4x256xf32>,
    %c0_109 = arith.constant 0 : index
    %c127_110 = arith.constant 127 : index
    %170 = vector.load %arg7[%c0_109, %c127_110] : memref<8x512xf32, #tpu.memory_space<vmem>>, vector<4x256xf32>
    %171 = vector.extract_strided_slice %12 {offsets = [0, 0], sizes = [1, 256], strides = [1, 1]} : vector<3x256xf32> to vector<1x256xf32>
    %172 = vector.broadcast %171 : vector<1x256xf32> to vector<4x256xf32>
    %173 = arith.mulf %170, %172 : vector<4x256xf32>
    %c24_111 = arith.constant 24 : index
    %c0_112 = arith.constant 0 : index
    %174 = vector.load %arg8[%c24_111, %c0_112] : memref<72x256xf32, #tpu.memory_space<vmem>>, vector<4x256xf32>
    tpu.vector_store %arg8[%c24_111, %c0_112], %173 {strides = array<i32>} : memref<72x256xf32, #tpu.memory_space<vmem>>, vector<4x256xf32>,
    %c0_113 = arith.constant 0 : index
    %c128_114 = arith.constant 128 : index
    %175 = vector.load %arg7[%c0_113, %c128_114] : memref<8x512xf32, #tpu.memory_space<vmem>>, vector<4x256xf32>
    %c32_115 = arith.constant 32 : index
    %c0_116 = arith.constant 0 : index
    %176 = vector.load %arg8[%c32_115, %c0_116] : memref<72x256xf32, #tpu.memory_space<vmem>>, vector<4x256xf32>
    tpu.vector_store %arg8[%c32_115, %c0_116], %175 {strides = array<i32>} : memref<72x256xf32, #tpu.memory_space<vmem>>, vector<4x256xf32>,
    %c0_117 = arith.constant 0 : index
    %c129_118 = arith.constant 129 : index
    %177 = vector.load %arg7[%c0_117, %c129_118] : memref<8x512xf32, #tpu.memory_space<vmem>>, vector<4x256xf32>
    %178 = vector.extract_strided_slice %12 {offsets = [2, 0], sizes = [1, 256], strides = [1, 1]} : vector<3x256xf32> to vector<1x256xf32>
    %179 = vector.broadcast %178 : vector<1x256xf32> to vector<4x256xf32>
    %180 = arith.mulf %177, %179 : vector<4x256xf32>
    %c40_119 = arith.constant 40 : index
    %c0_120 = arith.constant 0 : index
    %181 = vector.load %arg8[%c40_119, %c0_120] : memref<72x256xf32, #tpu.memory_space<vmem>>, vector<4x256xf32>
    tpu.vector_store %arg8[%c40_119, %c0_120], %180 {strides = array<i32>} : memref<72x256xf32, #tpu.memory_space<vmem>>, vector<4x256xf32>,
    %c0_121 = arith.constant 0 : index
    %c143_122 = arith.constant 143 : index
    %182 = vector.load %arg7[%c0_121, %c143_122] : memref<8x512xf32, #tpu.memory_space<vmem>>, vector<4x256xf32>
    %183 = vector.extract_strided_slice %12 {offsets = [0, 0], sizes = [1, 256], strides = [1, 1]} : vector<3x256xf32> to vector<1x256xf32>
    %184 = vector.broadcast %183 : vector<1x256xf32> to vector<4x256xf32>
    %185 = arith.mulf %182, %184 : vector<4x256xf32>
    %c48_123 = arith.constant 48 : index
    %c0_124 = arith.constant 0 : index
    %186 = vector.load %arg8[%c48_123, %c0_124] : memref<72x256xf32, #tpu.memory_space<vmem>>, vector<4x256xf32>
    tpu.vector_store %arg8[%c48_123, %c0_124], %185 {strides = array<i32>} : memref<72x256xf32, #tpu.memory_space<vmem>>, vector<4x256xf32>,
    %c0_125 = arith.constant 0 : index
    %c144_126 = arith.constant 144 : index
    %187 = vector.load %arg7[%c0_125, %c144_126] : memref<8x512xf32, #tpu.memory_space<vmem>>, vector<4x256xf32>
    %c56_127 = arith.constant 56 : index
    %c0_128 = arith.constant 0 : index
    %188 = vector.load %arg8[%c56_127, %c0_128] : memref<72x256xf32, #tpu.memory_space<vmem>>, vector<4x256xf32>
    tpu.vector_store %arg8[%c56_127, %c0_128], %187 {strides = array<i32>} : memref<72x256xf32, #tpu.memory_space<vmem>>, vector<4x256xf32>,
    %c0_129 = arith.constant 0 : index
    %c145_130 = arith.constant 145 : index
    %189 = vector.load %arg7[%c0_129, %c145_130] : memref<8x512xf32, #tpu.memory_space<vmem>>, vector<4x256xf32>
    %190 = vector.extract_strided_slice %12 {offsets = [2, 0], sizes = [1, 256], strides = [1, 1]} : vector<3x256xf32> to vector<1x256xf32>
    %191 = vector.broadcast %190 : vector<1x256xf32> to vector<4x256xf32>
    %192 = arith.mulf %189, %191 : vector<4x256xf32>
    %c64_131 = arith.constant 64 : index
    %c0_132 = arith.constant 0 : index
    %193 = vector.load %arg8[%c64_131, %c0_132] : memref<72x256xf32, #tpu.memory_space<vmem>>, vector<4x256xf32>
    tpu.vector_store %arg8[%c64_131, %c0_132], %192 {strides = array<i32>} : memref<72x256xf32, #tpu.memory_space<vmem>>, vector<4x256xf32>,
    %194 = vector.extract_strided_slice %11 {offsets = [4, 0], sizes = [8, 72], strides = [1, 1]} : vector<20x72xf32> to vector<8x72xf32>
    %c0_133 = arith.constant 0 : index
    %c0_134 = arith.constant 0 : index
    %195 = vector.load %arg8[%c0_133, %c0_134] : memref<72x256xf32, #tpu.memory_space<vmem>>, vector<72x256xf32>
    %cst_135 = arith.constant dense<0.000000e+00> : vector<8x256xf32>
    %196 = tpu.matmul %194, %195, %cst_135 {dimension_numbers = #tpu.dot_dimension_numbers<[1], [0], [0], [1], [0, 0, 1, 1], [], []>} : vector<8x72xf32>, vector<72x256xf32>, vector<8x256xf32> -> vector<8x256xf32>
    %197 = vector.broadcast %22 : vector<8x1xf32> to vector<8x256xf32>
    %198 = arith.addf %196, %197 : vector<8x256xf32>
    %cst_136 = arith.constant -1.000000e+00 : f32
    %cst_137 = arith.constant 1.000000e+00 : f32
    %199 = vector.broadcast %cst_136 : f32 to vector<8x256xf32>
    %200 = arith.maximumf %199, %198 : vector<8x256xf32>
    %201 = vector.broadcast %cst_137 : f32 to vector<8x256xf32>
    %202 = arith.minimumf %201, %200 : vector<8x256xf32>
    %203 = arith.subf %198, %202 : vector<8x256xf32>
    %204 = vector.shape_cast %203 : vector<8x256xf32> to vector<1x8x256xf32>
    %cst_138 = arith.constant dense<0.000000e+00> : vector<1xf32>
    %205 = vector.multi_reduction <add>, %204, %cst_138 [1, 2] : vector<1x8x256xf32> to vector<1xf32>
    %206 = vector.shape_cast %205 : vector<1xf32> to vector<1x1x1xf32>
    %207 = vector.extract %206[0, 0, 0] : f32 from vector<1x1x1xf32>
    %cst_139 = arith.constant 4.8828125E-4 : f32
    %208 = arith.mulf %207, %cst_139 : f32
    %209 = vector.broadcast %208 : f32 to vector<8x256xf32>
    %210 = arith.subf %203, %209 : vector<8x256xf32>
    %211 = arith.mulf %210, %210 : vector<8x256xf32>
    %212 = vector.shape_cast %211 : vector<8x256xf32> to vector<1x8x256xf32>
    %cst_140 = arith.constant dense<0.000000e+00> : vector<1xf32>
    %213 = vector.multi_reduction <add>, %212, %cst_140 [1, 2] : vector<1x8x256xf32> to vector<1xf32>
    %214 = vector.shape_cast %213 : vector<1xf32> to vector<1x1x1xf32>
    %215 = vector.extract %214[0, 0, 0] : f32 from vector<1x1x1xf32>
    %cst_141 = arith.constant 4.8828125E-4 : f32
    %216 = arith.mulf %215, %cst_141 : f32
    %cst_142 = arith.constant 9.99999974E-6 : f32
    %217 = arith.addf %216, %cst_142 : f32
    %218 = math.rsqrt %217 : f32
    %219 = vector.broadcast %218 : f32 to vector<8x256xf32>
    %220 = arith.mulf %210, %219 : vector<8x256xf32>
    %221 = vector.broadcast %19 : vector<8x1xf32> to vector<8x256xf32>
    %222 = arith.mulf %220, %221 : vector<8x256xf32>
    %223 = vector.broadcast %20 : vector<8x1xf32> to vector<8x256xf32>
    %224 = arith.addf %222, %223 : vector<8x256xf32>
    %c0_143 = arith.constant 0 : index
    %c128_144 = arith.constant 128 : index
    %225 = vector.load %arg7[%c0_143, %c128_144] : memref<8x512xf32, #tpu.memory_space<vmem>>, vector<8x256xf32>
    tpu.vector_store %arg7[%c0_143, %c128_144], %224 {strides = array<i32>} : memref<8x512xf32, #tpu.memory_space<vmem>>, vector<8x256xf32>,
    %c0_145 = arith.constant 0 : index
    %c111_146 = arith.constant 111 : index
    %226 = vector.load %arg7[%c0_145, %c111_146] : memref<8x512xf32, #tpu.memory_space<vmem>>, vector<8x256xf32>
    %227 = vector.extract_strided_slice %12 {offsets = [0, 0], sizes = [1, 256], strides = [1, 1]} : vector<3x256xf32> to vector<1x256xf32>
    %228 = vector.broadcast %227 : vector<1x256xf32> to vector<8x256xf32>
    %229 = arith.mulf %226, %228 : vector<8x256xf32>
    %c0_147 = arith.constant 0 : index
    %c0_148 = arith.constant 0 : index
    %230 = vector.load %arg8[%c0_147, %c0_148] : memref<72x256xf32, #tpu.memory_space<vmem>>, vector<8x256xf32>
    tpu.vector_store %arg8[%c0_147, %c0_148], %229 {strides = array<i32>} : memref<72x256xf32, #tpu.memory_space<vmem>>, vector<8x256xf32>,
    %c0_149 = arith.constant 0 : index
    %c112_150 = arith.constant 112 : index
    %231 = vector.load %arg7[%c0_149, %c112_150] : memref<8x512xf32, #tpu.memory_space<vmem>>, vector<8x256xf32>
    %c8_151 = arith.constant 8 : index
    %c0_152 = arith.constant 0 : index
    %232 = vector.load %arg8[%c8_151, %c0_152] : memref<72x256xf32, #tpu.memory_space<vmem>>, vector<8x256xf32>
    tpu.vector_store %arg8[%c8_151, %c0_152], %231 {strides = array<i32>} : memref<72x256xf32, #tpu.memory_space<vmem>>, vector<8x256xf32>,
    %c0_153 = arith.constant 0 : index
    %c113_154 = arith.constant 113 : index
    %233 = vector.load %arg7[%c0_153, %c113_154] : memref<8x512xf32, #tpu.memory_space<vmem>>, vector<8x256xf32>
    %234 = vector.extract_strided_slice %12 {offsets = [2, 0], sizes = [1, 256], strides = [1, 1]} : vector<3x256xf32> to vector<1x256xf32>
    %235 = vector.broadcast %234 : vector<1x256xf32> to vector<8x256xf32>
    %236 = arith.mulf %233, %235 : vector<8x256xf32>
    %c16_155 = arith.constant 16 : index
    %c0_156 = arith.constant 0 : index
    %237 = vector.load %arg8[%c16_155, %c0_156] : memref<72x256xf32, #tpu.memory_space<vmem>>, vector<8x256xf32>
    tpu.vector_store %arg8[%c16_155, %c0_156], %236 {strides = array<i32>} : memref<72x256xf32, #tpu.memory_space<vmem>>, vector<8x256xf32>,
    %c0_157 = arith.constant 0 : index
    %c127_158 = arith.constant 127 : index
    %238 = vector.load %arg7[%c0_157, %c127_158] : memref<8x512xf32, #tpu.memory_space<vmem>>, vector<8x256xf32>
    %239 = vector.extract_strided_slice %12 {offsets = [0, 0], sizes = [1, 256], strides = [1, 1]} : vector<3x256xf32> to vector<1x256xf32>
    %240 = vector.broadcast %239 : vector<1x256xf32> to vector<8x256xf32>
    %241 = arith.mulf %238, %240 : vector<8x256xf32>
    %c24_159 = arith.constant 24 : index
    %c0_160 = arith.constant 0 : index
    %242 = vector.load %arg8[%c24_159, %c0_160] : memref<72x256xf32, #tpu.memory_space<vmem>>, vector<8x256xf32>
    tpu.vector_store %arg8[%c24_159, %c0_160], %241 {strides = array<i32>} : memref<72x256xf32, #tpu.memory_space<vmem>>, vector<8x256xf32>,
    %c0_161 = arith.constant 0 : index
    %c128_162 = arith.constant 128 : index
    %243 = vector.load %arg7[%c0_161, %c128_162] : memref<8x512xf32, #tpu.memory_space<vmem>>, vector<8x256xf32>
    %c32_163 = arith.constant 32 : index
    %c0_164 = arith.constant 0 : index
    %244 = vector.load %arg8[%c32_163, %c0_164] : memref<72x256xf32, #tpu.memory_space<vmem>>, vector<8x256xf32>
    tpu.vector_store %arg8[%c32_163, %c0_164], %243 {strides = array<i32>} : memref<72x256xf32, #tpu.memory_space<vmem>>, vector<8x256xf32>,
    %c0_165 = arith.constant 0 : index
    %c129_166 = arith.constant 129 : index
    %245 = vector.load %arg7[%c0_165, %c129_166] : memref<8x512xf32, #tpu.memory_space<vmem>>, vector<8x256xf32>
    %246 = vector.extract_strided_slice %12 {offsets = [2, 0], sizes = [1, 256], strides = [1, 1]} : vector<3x256xf32> to vector<1x256xf32>
    %247 = vector.broadcast %246 : vector<1x256xf32> to vector<8x256xf32>
    %248 = arith.mulf %245, %247 : vector<8x256xf32>
    %c40_167 = arith.constant 40 : index
    %c0_168 = arith.constant 0 : index
    %249 = vector.load %arg8[%c40_167, %c0_168] : memref<72x256xf32, #tpu.memory_space<vmem>>, vector<8x256xf32>
    tpu.vector_store %arg8[%c40_167, %c0_168], %248 {strides = array<i32>} : memref<72x256xf32, #tpu.memory_space<vmem>>, vector<8x256xf32>,
    %c0_169 = arith.constant 0 : index
    %c143_170 = arith.constant 143 : index
    %250 = vector.load %arg7[%c0_169, %c143_170] : memref<8x512xf32, #tpu.memory_space<vmem>>, vector<8x256xf32>
    %251 = vector.extract_strided_slice %12 {offsets = [0, 0], sizes = [1, 256], strides = [1, 1]} : vector<3x256xf32> to vector<1x256xf32>
    %252 = vector.broadcast %251 : vector<1x256xf32> to vector<8x256xf32>
    %253 = arith.mulf %250, %252 : vector<8x256xf32>
    %c48_171 = arith.constant 48 : index
    %c0_172 = arith.constant 0 : index
    %254 = vector.load %arg8[%c48_171, %c0_172] : memref<72x256xf32, #tpu.memory_space<vmem>>, vector<8x256xf32>
    tpu.vector_store %arg8[%c48_171, %c0_172], %253 {strides = array<i32>} : memref<72x256xf32, #tpu.memory_space<vmem>>, vector<8x256xf32>,
    %c0_173 = arith.constant 0 : index
    %c144_174 = arith.constant 144 : index
    %255 = vector.load %arg7[%c0_173, %c144_174] : memref<8x512xf32, #tpu.memory_space<vmem>>, vector<8x256xf32>
    %c56_175 = arith.constant 56 : index
    %c0_176 = arith.constant 0 : index
    %256 = vector.load %arg8[%c56_175, %c0_176] : memref<72x256xf32, #tpu.memory_space<vmem>>, vector<8x256xf32>
    tpu.vector_store %arg8[%c56_175, %c0_176], %255 {strides = array<i32>} : memref<72x256xf32, #tpu.memory_space<vmem>>, vector<8x256xf32>,
    %c0_177 = arith.constant 0 : index
    %c145_178 = arith.constant 145 : index
    %257 = vector.load %arg7[%c0_177, %c145_178] : memref<8x512xf32, #tpu.memory_space<vmem>>, vector<8x256xf32>
    %258 = vector.extract_strided_slice %12 {offsets = [2, 0], sizes = [1, 256], strides = [1, 1]} : vector<3x256xf32> to vector<1x256xf32>
    %259 = vector.broadcast %258 : vector<1x256xf32> to vector<8x256xf32>
    %260 = arith.mulf %257, %259 : vector<8x256xf32>
    %c64_179 = arith.constant 64 : index
    %c0_180 = arith.constant 0 : index
    %261 = vector.load %arg8[%c64_179, %c0_180] : memref<72x256xf32, #tpu.memory_space<vmem>>, vector<8x256xf32>
    tpu.vector_store %arg8[%c64_179, %c0_180], %260 {strides = array<i32>} : memref<72x256xf32, #tpu.memory_space<vmem>>, vector<8x256xf32>,
    %262 = vector.extract_strided_slice %11 {offsets = [16, 0], sizes = [4, 72], strides = [1, 1]} : vector<20x72xf32> to vector<4x72xf32>
    %c0_181 = arith.constant 0 : index
    %c0_182 = arith.constant 0 : index
    %263 = vector.load %arg8[%c0_181, %c0_182] : memref<72x256xf32, #tpu.memory_space<vmem>>, vector<72x256xf32>
    %cst_183 = arith.constant dense<0.000000e+00> : vector<4x256xf32>
    %264 = tpu.matmul %262, %263, %cst_183 {dimension_numbers = #tpu.dot_dimension_numbers<[1], [0], [0], [1], [0, 0, 1, 1], [], []>} : vector<4x72xf32>, vector<72x256xf32>, vector<4x256xf32> -> vector<4x256xf32>
    %265 = arith.addf %152, %264 : vector<4x256xf32>
    %266 = vector.broadcast %23 : vector<4x1xf32> to vector<4x256xf32>
    %267 = arith.mulf %266, %265 : vector<4x256xf32>
    %268 = arith.addf %7, %267 : vector<4x256xf32>
    %c0_184 = arith.constant 0 : index
    %c0_185 = arith.constant 0 : index
    %c0_186 = arith.constant 0 : index
    %269 = vector.load %arg6[%c0_184, %c0_185, %c0_186] : memref<1x4x256xf32, #tpu.memory_space<vmem>>, vector<1x4x256xf32>
    %270 = vector.shape_cast %269 : vector<1x4x256xf32> to vector<4x256xf32>
    %271 = vector.shape_cast %268 : vector<4x256xf32> to vector<1x4x256xf32>
    tpu.vector_store %arg6[%c0_184, %c0_185, %c0_186], %271 {strides = array<i32>} : memref<1x4x256xf32, #tpu.memory_space<vmem>>, vector<1x4x256xf32>,
    return
  }
  func.func @transform_0(%arg0: i32) -> (i32, i32, i32) {
    %c0_i32 = arith.constant 0 : i32
    %c0_i32_0 = arith.constant 0 : i32
    %c0_i32_1 = arith.constant 0 : i32
    return %arg0, %c0_i32, %c0_i32_0 : i32, i32, i32
  }
  func.func @transform_1(%arg0: i32) -> (i32, i32, i32) {
    %c0_i32 = arith.constant 0 : i32
    %c0_i32_0 = arith.constant 0 : i32
    %c0_i32_1 = arith.constant 0 : i32
    return %arg0, %c0_i32, %c0_i32_0 : i32, i32, i32
  }
  func.func @transform_2(%arg0: i32) -> (i32, i32) {
    %c0_i32 = arith.constant 0 : i32
    %c0_i32_0 = arith.constant 0 : i32
    %c0_i32_1 = arith.constant 0 : i32
    return %c0_i32, %c0_i32_0 : i32, i32
  }
  func.func @transform_3(%arg0: i32) -> (i32, i32) {
    %c0_i32 = arith.constant 0 : i32
    %c0_i32_0 = arith.constant 0 : i32
    %c0_i32_1 = arith.constant 0 : i32
    return %c0_i32, %c0_i32_0 : i32, i32
  }
  func.func @transform_4(%arg0: i32) -> (i32, i32) {
    %c0_i32 = arith.constant 0 : i32
    %c0_i32_0 = arith.constant 0 : i32
    %c0_i32_1 = arith.constant 0 : i32
    return %c0_i32, %c0_i32_0 : i32, i32
  }
  func.func @transform_5(%arg0: i32) -> (i32, i32, i32) {
    %c0_i32 = arith.constant 0 : i32
    %c0_i32_0 = arith.constant 0 : i32
    %c0_i32_1 = arith.constant 0 : i32
    return %arg0, %c0_i32, %c0_i32_0 : i32, i32, i32
  }
}

</mosaic_0001>

<llo_original>
// kernel: tpu_custom_call.1
$region0: #{tpu_custom_call.1}
  #allocation0 [shape = 'u32[]', space=smem, size = 0x4, offset = 0x4, fixed_abs, tag = 'smem constant byte address 0x4 - core index']
  #allocation1 [shape = 'u32[144,128]{1,0:T(1,128)}', space=vmem, size = 0x12000, scoped, tag = 'internal scratch']
  #allocation2 [shape = 'f32[8,512]{1,0:T(8,128)}', space=vmem, size = 0x4000, scoped, tag = 'scratch operand']
  #allocation3 [shape = 'f32[72,256]{1,0:T(8,128)}', space=vmem, size = 0x12000, scoped, tag = 'scratch operand']
  %s0 = inlined_call_operand.vmem [shape: f32[2,4,256], index: 0, kind: input, shape index: {}]
  %s1 = inlined_call_operand.vmem [shape: f32[2,4,256], index: 1, kind: input, shape index: {}]
  %s2 = inlined_call_operand.vmem [shape: f32[56,1], index: 2, kind: input, shape index: {}]
  %s3 = inlined_call_operand.vmem [shape: f32[20,72], index: 3, kind: input, shape index: {}]
  %s4 = inlined_call_operand.vmem [shape: f32[3,256], index: 4, kind: input, shape index: {}]
  %s5 = inlined_call_operand.hbm [shape: f32[2,4,256], index: 5, kind: output, shape index: {}]
  %s6 = sld [smem:[#allocation0]]
  $region53: #{tpu_custom_call.1} parent=0
    _
  %s8 = ssub.s32 1, %s6
  %s9 = scalar_select 0, %s8, %s6
  $region1: #{tpu_custom_call.1} parent=0
    #allocation4 [shape = 'u8[8192]{0}', space=vmem, size = 0x2000, scoped, tag = 'output window, operand 0']
    #allocation5 [shape = 's32[2]{0}', space=sflag, size = 0x8, scoped, tag = 'scoped memory for tpu_custom_call.1']
    %10 = vsyncpa [#allocation5], 0
    %s11 = scalar_lea.sflag [#allocation5], 1
    %12 = vsyncpa %s11, 0
    loop: start=0, step=1, limit=4
    $region2: #{tpu_custom_call.1} parent=1 // loop_pre_header
      _
    $region3: #{tpu_custom_call.1} parent=1 // loop_header
      %s14 = sphi 0, %s18
      %p15 = scmp.ge.s32.totalorder %s14, 4
      %s24 = sphi 0, %s26
      %s27 = sphi 0, %s24
      %s28 = sphi 0, %s27
      %s44 = sphi 0, %s28
      %s50 = sphi 0, %s52
      %s53 = sphi 0, %s50
      %s54 = sphi 0, %s53
      %s70 = sphi 0, %s54
      %s74 = sphi 0, %s74
      %s76 = sphi 0, %s74
      %s77 = sphi 0, %s76
      %s91 = sphi 0, %s77
      %s95 = sphi 0, %s95
      %s97 = sphi 0, %s95
      %s98 = sphi 0, %s97
      %s112 = sphi 0, %s98
      %s116 = sphi 0, %s116
      %s118 = sphi 0, %s116
      %s119 = sphi 0, %s118
      %s133 = sphi 0, %s119
      %s139 = sphi 0, %s141
      %s142 = sphi 0, %s139
      %s143 = sphi 0, %s142
      %s159 = sphi 0, %s143
    $region4: #{tpu_custom_call.1} parent=1 // loop_header_branch
      %17 = sbr.rel (%p15) target = $region8
    $region5: #{tpu_custom_call.1} parent=1 // loop_body
      %s19 = ssub.s32 %s14, 1
      %s20 = ssub.s32 %s14, 2
      %s21 = sadd.s32 %s14, 1
      %s22 = ssub.s32 %s14, %s21
      %p23 = scmp.eq.s32.totalorder %s22, 0
      %s25 = sadd.s32 %s24, 1
      %s26 = scalar_select %p23, %s24, %s25
      %p29 = pneg %p23
      %p30 = scmp.eq.s32.totalorder %s14, 1
      %p31 = por %p29, %p30
      %p32 = scmp.ne.s32.totalorder %s24, %s27
      %p33 = scmp.eq.s32.totalorder %s14, 0
      %p34 = por %p32, %p33
      %p35 = scmp.ne.s32.totalorder %s24, %s27
      %p36 = scmp.eq.s32.totalorder %s19, 1
      %p37 = por %p35, %p36
      %p38 = scmp.ne.s32.totalorder %s27, %s28
      %p39 = scmp.eq.s32.totalorder %s19, 0
      %p40 = por %p38, %p39
      %p41 = scmp.ne.s32.totalorder %s27, %s28
      %p42 = scmp.eq.s32.totalorder %s20, 1
      %p43 = por %p41, %p42
      %p45 = scmp.ne.s32.totalorder %s28, %s44
      %p46 = scmp.eq.s32.totalorder %s20, 0
      %p47 = por %p45, %p46
      %s48 = ssub.s32 %s14, %s21
      %p49 = scmp.eq.s32.totalorder %s48, 0
      %s51 = sadd.s32 %s50, 1
      %s52 = scalar_select %p49, %s50, %s51
      %p55 = pneg %p49
      %p56 = scmp.eq.s32.totalorder %s14, 1
      %p57 = por %p55, %p56
      %p58 = scmp.ne.s32.totalorder %s50, %s53
      %p59 = scmp.eq.s32.totalorder %s14, 0
      %p60 = por %p58, %p59
      %p61 = scmp.ne.s32.totalorder %s50, %s53
      %p62 = scmp.eq.s32.totalorder %s19, 1
      %p63 = por %p61, %p62
      %p64 = scmp.ne.s32.totalorder %s53, %s54
      %p65 = scmp.eq.s32.totalorder %s19, 0
      %p66 = por %p64, %p65
      %p67 = scmp.ne.s32.totalorder %s53, %s54
      %p68 = scmp.eq.s32.totalorder %s20, 1
      %p69 = por %p67, %p68
      %p71 = scmp.ne.s32.totalorder %s54, %s70
      %p72 = scmp.eq.s32.totalorder %s20, 0
      %p73 = por %p71, %p72
      %s75 = sadd.s32 %s74, 1
      %p78 = scmp.eq.s32.totalorder %s14, 1
      %p79 = scmp.ne.s32.totalorder %s74, %s76
      %p80 = scmp.eq.s32.totalorder %s14, 0
      %p81 = por %p79, %p80
      %p82 = scmp.ne.s32.totalorder %s74, %s76
      %p83 = scmp.eq.s32.totalorder %s19, 1
      %p84 = por %p82, %p83
      %p85 = scmp.ne.s32.totalorder %s76, %s77
      %p86 = scmp.eq.s32.totalorder %s19, 0
      %p87 = por %p85, %p86
      %p88 = scmp.ne.s32.totalorder %s76, %s77
      %p89 = scmp.eq.s32.totalorder %s20, 1
      %p90 = por %p88, %p89
      %p92 = scmp.ne.s32.totalorder %s77, %s91
      %p93 = scmp.eq.s32.totalorder %s20, 0
      %p94 = por %p92, %p93
      %s96 = sadd.s32 %s95, 1
      %p99 = scmp.eq.s32.totalorder %s14, 1
      %p100 = scmp.ne.s32.totalorder %s95, %s97
      %p101 = scmp.eq.s32.totalorder %s14, 0
      %p102 = por %p100, %p101
      %p103 = scmp.ne.s32.totalorder %s95, %s97
      %p104 = scmp.eq.s32.totalorder %s19, 1
      %p105 = por %p103, %p104
      %p106 = scmp.ne.s32.totalorder %s97, %s98
      %p107 = scmp.eq.s32.totalorder %s19, 0
      %p108 = por %p106, %p107
      %p109 = scmp.ne.s32.totalorder %s97, %s98
      %p110 = scmp.eq.s32.totalorder %s20, 1
      %p111 = por %p109, %p110
      %p113 = scmp.ne.s32.totalorder %s98, %s112
      %p114 = scmp.eq.s32.totalorder %s20, 0
      %p115 = por %p113, %p114
      %s117 = sadd.s32 %s116, 1
      %p120 = scmp.eq.s32.totalorder %s14, 1
      %p121 = scmp.ne.s32.totalorder %s116, %s118
      %p122 = scmp.eq.s32.totalorder %s14, 0
      %p123 = por %p121, %p122
      %p124 = scmp.ne.s32.totalorder %s116, %s118
      %p125 = scmp.eq.s32.totalorder %s19, 1
      %p126 = por %p124, %p125
      %p127 = scmp.ne.s32.totalorder %s118, %s119
      %p128 = scmp.eq.s32.totalorder %s19, 0
      %p129 = por %p127, %p128
      %p130 = scmp.ne.s32.totalorder %s118, %s119
      %p131 = scmp.eq.s32.totalorder %s20, 1
      %p132 = por %p130, %p131
      %p134 = scmp.ne.s32.totalorder %s119, %s133
      %p135 = scmp.eq.s32.totalorder %s20, 0
      %p136 = por %p134, %p135
      %s137 = ssub.s32 %s14, %s21
      %p138 = scmp.eq.s32.totalorder %s137, 0
      %s140 = sadd.s32 %s139, 1
      %s141 = scalar_select %p138, %s139, %s140
      %p144 = pneg %p138
      %p145 = scmp.eq.s32.totalorder %s14, 1
      %p146 = por %p144, %p145
      %p147 = scmp.ne.s32.totalorder %s139, %s142
      %p148 = scmp.eq.s32.totalorder %s14, 0
      %p149 = por %p147, %p148
      %p150 = scmp.ne.s32.totalorder %s139, %s142
      %p151 = scmp.eq.s32.totalorder %s19, 1
      %p152 = por %p150, %p151
      %p153 = scmp.ne.s32.totalorder %s142, %s143
      %p154 = scmp.eq.s32.totalorder %s19, 0
      %p155 = por %p153, %p154
      %p156 = scmp.ne.s32.totalorder %s142, %s143
      %p157 = scmp.eq.s32.totalorder %s20, 1
      %p158 = por %p156, %p157
      %p160 = scmp.ne.s32.totalorder %s143, %s159
      %p161 = scmp.eq.s32.totalorder %s20, 0
      %p162 = por %p160, %p161
      %p163 = scmp.le.s32.totalorder 1, %s14
      %p164 = scmp.lt.s32.totalorder %s14, 3
      %p165 = pnand %p163, %p164
      %p166 = pneg %p165
      // Predicated region
      $region9: #{tpu_custom_call.1} parent=5 // pred_check
        _
      $region10: #{tpu_custom_call.1} parent=5 // pred_check_branch
        %168 = sbr.rel (%p165) target = $region12
      $region11: #{tpu_custom_call.1} parent=5 // pred_region
        %s169 = ssub.s32 %s14, 1
        // Predicated region
        $region13: #{tpu_custom_call.1} parent=11 // pred_check
          %p170 = pneg %p87
        $region14: #{tpu_custom_call.1} parent=11 // pred_check_branch
          %172 = sbr.rel (%p170) target = $region16
        $region15: #{tpu_custom_call.1} parent=11 // pred_region
          _
        $region16: #{tpu_custom_call.1} parent=11 // pred_fallthru
          _
        // Predicated region
        $region17: #{tpu_custom_call.1} parent=11 // pred_check
          %p173 = pneg %p108
        $region18: #{tpu_custom_call.1} parent=11 // pred_check_branch
          %175 = sbr.rel (%p173) target = $region20
        $region19: #{tpu_custom_call.1} parent=11 // pred_region
          _
        $region20: #{tpu_custom_call.1} parent=11 // pred_fallthru
          _
        // Predicated region
        $region21: #{tpu_custom_call.1} parent=11 // pred_check
          %p176 = pneg %p129
        $region22: #{tpu_custom_call.1} parent=11 // pred_check_branch
          %178 = sbr.rel (%p176) target = $region24
        $region23: #{tpu_custom_call.1} parent=11 // pred_region
          _
        $region24: #{tpu_custom_call.1} parent=11 // pred_fallthru
          _
      $region12: #{tpu_custom_call.1} parent=5 // pred_fallthru
        _
      %p179 = scmp.lt.s32.totalorder %s14, 2
      // Predicated region
      $region25: #{tpu_custom_call.1} parent=5 // pred_check
        %p180 = pneg %p179
      $region26: #{tpu_custom_call.1} parent=5 // pred_check_branch
        %182 = sbr.rel (%p180) target = $region28
      $region27: #{tpu_custom_call.1} parent=5 // pred_region
        // Predicated region
        $region29: #{tpu_custom_call.1} parent=27 // pred_check
          %p183 = pneg %p34
        $region30: #{tpu_custom_call.1} parent=27 // pred_check_branch
          %185 = sbr.rel (%p183) target = $region32
        $region31: #{tpu_custom_call.1} parent=27 // pred_region
          %p186 = scmp.lt.s32.totalorder %s14, 1
          %s187 = scalar_select %p186, %s14, 1
          %s188 = smul.addr %s187, 2
          %s189 = smul.addr %s188, 4
          %s190 = scalar_lea.vmem %s0, %s189
        $region32: #{tpu_custom_call.1} parent=27 // pred_fallthru
          _
        // Predicated region
        $region33: #{tpu_custom_call.1} parent=27 // pred_check
          %p191 = pneg %p60
        $region34: #{tpu_custom_call.1} parent=27 // pred_check_branch
          %193 = sbr.rel (%p191) target = $region36
        $region35: #{tpu_custom_call.1} parent=27 // pred_region
          %p194 = scmp.lt.s32.totalorder %s14, 1
          %s195 = scalar_select %p194, %s14, 1
          %s196 = smul.addr %s195, 2
          %s197 = smul.addr %s196, 4
          %s198 = scalar_lea.vmem %s1, %s197
        $region36: #{tpu_custom_call.1} parent=27 // pred_fallthru
          _
      $region28: #{tpu_custom_call.1} parent=5 // pred_fallthru
        _
      %p199 = scmp.le.s32.totalorder 1, %s14
      %p200 = scmp.lt.s32.totalorder %s14, 3
      %p201 = pnand %p199, %p200
      %p202 = pneg %p201
      // Predicated region
      $region37: #{tpu_custom_call.1} parent=5 // pred_check
        _
      $region38: #{tpu_custom_call.1} parent=5 // pred_check_branch
        %204 = sbr.rel (%p201) target = $region40
      $region39: #{tpu_custom_call.1} parent=5 // pred_region
        %s205 = ssub.s32 %s14, 1
        %p206 = scmp.lt.s32.totalorder %s19, 1
        %s207 = scalar_select %p206, %s19, 1
        %s208 = smul.addr %s207, 2
        %s209 = smul.addr %s208, 4
        %s210 = scalar_lea.vmem %s0, %s209
        %p211 = pneg %p40
        %p212 = pneg %p37
        %p213 = scmp.lt.s32.totalorder %s19, 1
        %s214 = scalar_select %p213, %s19, 1
        %s215 = smul.addr %s214, 2
        %s216 = smul.addr %s215, 4
        %s217 = scalar_lea.vmem %s1, %s216
        %p218 = pneg %p66
        %p219 = pneg %p63
        %p220 = pneg %p87
        %p221 = pneg %p84
        %p222 = pneg %p108
        %p223 = pneg %p105
        %p224 = pneg %p129
        %p225 = pneg %p126
        %p226 = pneg %p155
        %p227 = pneg %p152
        %s228 = sand.u32 %s142, 1
        %s229 = scalar_lea.sflag [#allocation5], %s228
        %s230 = sand.u32 %s142, 1
        %s231 = smul.addr %s230, 8
        %s232 = scalar_lea.vmem [#allocation4], %s231
        %p233 = scmp.lt.s32.totalorder %s19, 1
        %s234 = scalar_select %p233, %s19, 1
        %s235 = smul.addr %s234, 2
        %s236 = smul.addr %s235, 4
        %s237 = scalar_lea.vmem %s0, %s236
        %p238 = scmp.lt.s32.totalorder %s19, 1
        %s239 = scalar_select %p238, %s19, 1
        %s240 = smul.addr %s239, 2
        %s241 = smul.addr %s240, 4
        %s242 = scalar_lea.vmem %s1, %s241
        %243 = vst [vmem:[#allocation2] sm:$0xff] 0.0
        %244 = vst [vmem:[#allocation2 + $0x18] sm:$0xff] 0.0
        %245 = vst [vmem:[#allocation3] sm:$0xff] 0.0
        %246 = vst [vmem:[#allocation3 + $0x8] sm:$0xff] 0.0
        %247 = vst [vmem:[#allocation3 + $0x10] sm:$0xff] 0.0
        %248 = vst [vmem:[#allocation3 + $0x18] sm:$0xff] 0.0
        %249 = vst [vmem:[#allocation3 + $0x20] sm:$0xff] 0.0
        %250 = vst [vmem:[#allocation3 + $0x28] sm:$0xff] 0.0
        %251 = vst [vmem:[#allocation3 + $0x30] sm:$0xff] 0.0
        %252 = vst [vmem:[#allocation3 + $0x38] sm:$0xff] 0.0
        %253 = vst [vmem:[#allocation3 + $0x40] sm:$0xff] 0.0
        %254 = vst [vmem:[#allocation3 + $0x48] sm:$0xff] 0.0
        %255 = vst [vmem:[#allocation3 + $0x50] sm:$0xff] 0.0
        %256 = vst [vmem:[#allocation3 + $0x58] sm:$0xff] 0.0
        %257 = vst [vmem:[#allocation3 + $0x60] sm:$0xff] 0.0
        %258 = vst [vmem:[#allocation3 + $0x68] sm:$0xff] 0.0
        %259 = vst [vmem:[#allocation3 + $0x70] sm:$0xff] 0.0
        %260 = vst [vmem:[#allocation3 + $0x78] sm:$0xff] 0.0
        %261 = vst [vmem:[#allocation3 + $0x80] sm:$0xff] 0.0
        %262 = vst [vmem:[#allocation3 + $0x88] sm:$0xff] 0.0
        %v263 = vld [vmem:[%s237] sm:$0xff]
        %v264 = vld [vmem:[%s242] sm:$0xff]
        %v265 = vld [vmem:[%s2] sm:$0xff]
        %v266 = vld [vmem:[%s2 + $0x8] sm:$0xff]
        %v267 = vld [vmem:[%s2 + $0x10] sm:$0xff]
        %v268 = vld [vmem:[%s2 + $0x18] sm:$0xff]
        %v269 = vld [vmem:[%s2 + $0x20] sm:$0xff]
        %v270 = vld [vmem:[%s2 + $0x28] sm:$0xff]
        %v271 = vld [vmem:[%s2 + $0x30] sm:$0xff]
        %v272 = vld [vmem:[%s3] sm:$0xff]
        %v273 = vld [vmem:[%s3 + $0x8] sm:$0xff]
        %v274 = vld [vmem:[%s3 + $0x10] sm:$0xf]
        %v275 = vld [vmem:[%s4] sm:$0x77]
        %v277 = vcombine.high %v263, %v263
        %vm279 = vcmask 1043456
        %v280 = vsel %vm279, %v263, 0.0
        %v281 = vsel %vm279, %v277, 0.0
        %v282 = vadd.f32 %v280, %v281
        %283 = vadd.xlane.f32.xlu0 %v282
        %v284 = vpop.xlane.xlu0 %283
        %v285 = vrot.slane %v284, 4
        %v286 = vadd.f32 %v284, %v285
        %v287 = vrot.slane %v286, 2
        %v288 = vadd.f32 %v286, %v287
        %v289 = vrot.slane %v288, 1
        %v290 = vadd.f32 %v288, %v289
        %s291 = vtos %v290
        %s292 = smul.f32 %s291, 0.0009765625
        %v293 = vstv %s292
        %v294 = vsub.f32 %v263, %v293
        %v295 = vmul.f32 %v294, %v294
        %v297 = vcombine.high %v295, %v295
        %v299 = vsel %vm279, %v295, 0.0
        %v300 = vsel %vm279, %v297, 0.0
        %v301 = vadd.f32 %v299, %v300
        %302 = vadd.xlane.f32.xlu0 %v301
        %v303 = vpop.xlane.xlu0 %302
        %v304 = vrot.slane %v303, 4
        %v305 = vadd.f32 %v303, %v304
        %v306 = vrot.slane %v305, 2
        %v307 = vadd.f32 %v305, %v306
        %v308 = vrot.slane %v307, 1
        %v309 = vadd.f32 %v307, %v308
        %s310 = vtos %v309
        %s311 = smul.f32 %s310, 0.0009765625
        %s312 = sadd.f32 %s311, 1e-05
        %v313 = vstv %s312
        %v314 = vrsqrt.pop %v313
        %s315 = vtos %v314
        %v316 = vstv %s315
        %v317 = vmul.f32 %v294, %v316
        %319 = vset.pattern.permute.xlu0 0
        %320 = vperm.xlu0 %319, %v265
        %v321 = vpop.permute.xlu0 %320
        %v323 = vunpack.c.l.s4 839922192
        %v324 = vunpack.c.0.s8 %v323
        %v325 = vlaneseq
        %v326 = vshrl.u32 %v325, 7
        %v327 = vsub.s32 %v324, %v326
        %v328 = vrot.slane %v321, %v327
        %v330 = vmul.f32 %v317, %v328
        %v332 = vunpack.c.l.s4 1985246804
        %v333 = vunpack.c.0.s8 %v332
        %v334 = vlaneseq
        %v335 = vshrl.u32 %v334, 7
        %v336 = vsub.s32 %v333, %v335
        %v337 = vrot.slane %v321, %v336
        %v339 = vadd.f32 %v330, %v337
        %v341 = vcombine.high %v339, %v339
        %343 = vst [vmem:[#allocation2 + $0x8] sm:$0xf] %v339
        %344 = vst [vmem:[#allocation2 + $0x10] sm:$0xf] %v341
        %v345 = vld [vmem:[#allocation2] sm:$0xf]
        %v346 = vld [vmem:[#allocation2 + $0x8] sm:$0xf]
        %v347 = vld [vmem:[#allocation2 + $0x10] sm:$0xf]
        %v349 = vlaneseq
        %v350 = vshrl.u32 %v349, 7
        %v351 = vsub.s32 0, %v350
        %v352 = vrot.slane %v275, %v351
        %v353 = vlaneseq
        %v354 = vshrl.u32 %v353, 7
        %v355 = vsub.s32 4, %v354
        %v356 = vrot.slane %v275, %v355
        %v359 = vlaneseq
        %v360 = vshrl.u32 %v359, 7
        %v361 = vsub.s32 0, %v360
        %v362 = vrot.slane %v352, %v361
        %v363 = vlaneseq
        %v364 = vshrl.u32 %v363, 7
        %v365 = vsub.s32 0, %v364
        %v366 = vrot.slane %v356, %v365
        %369 = vrot.lane.b32.xlu0 %v362, 111
        %v370 = vpop.permute.xlu0 %369
        %371 = vrot.lane.b32.xlu0 %v366, 111
        %v372 = vpop.permute.xlu0 %371
        %vm373 = vcmask 908288
        %v374 = vsel %vm373, %v370, %v372
        %v378 = vmul.f32 %v345, %v370
        %v379 = vmul.f32 %v346, %v374
        %v380 = vmul.f32 %v347, %v372
        %384 = vrot.lane.b32.xlu0 %v378, 17
        %v385 = vpop.permute.xlu0 %384
        %386 = vrot.lane.b32.xlu0 %v379, 17
        %v387 = vpop.permute.xlu0 %386
        %388 = vrot.lane.b32.xlu0 %v380, 17
        %v389 = vpop.permute.xlu0 %388
        %vm390 = vcmask 138240
        %v391 = vsel %vm390, %v385, %v387
        %v392 = vsel %vm390, %v387, %v389
        %395 = vst [vmem:[#allocation3] sm:$0xf] %v391
        %396 = vst [vmem:[#allocation3 + $0x8] sm:$0xf] %v392
        %v397 = vld [vmem:[#allocation2] sm:$0xf]
        %v398 = vld [vmem:[#allocation2 + $0x8] sm:$0xf]
        %v399 = vld [vmem:[#allocation2 + $0x10] sm:$0xf]
        %403 = vrot.lane.b32.xlu0 %v397, 16
        %v404 = vpop.permute.xlu0 %403
        %405 = vrot.lane.b32.xlu0 %v398, 16
        %v406 = vpop.permute.xlu0 %405
        %407 = vrot.lane.b32.xlu0 %v399, 16
        %v408 = vpop.permute.xlu0 %407
        %vm409 = vcmask 130048
        %v410 = vsel %vm409, %v404, %v406
        %v411 = vsel %vm409, %v406, %v408
        %414 = vst [vmem:[#allocation3 + $0x10] sm:$0xf] %v410
        %415 = vst [vmem:[#allocation3 + $0x18] sm:$0xf] %v411
        %v416 = vld [vmem:[#allocation2] sm:$0xf]
        %v417 = vld [vmem:[#allocation2 + $0x8] sm:$0xf]
        %v418 = vld [vmem:[#allocation2 + $0x10] sm:$0xf]
        %v419 = vlaneseq
        %v420 = vshrl.u32 %v419, 7
        %v421 = vsub.s32 2, %v420
        %v422 = vrot.slane %v275, %v421
        %v423 = vlaneseq
        %v424 = vshrl.u32 %v423, 7
        %v425 = vsub.s32 6, %v424
        %v426 = vrot.slane %v275, %v425
        %v429 = vlaneseq
        %v430 = vshrl.u32 %v429, 7
        %v431 = vsub.s32 2, %v430
        %v432 = vrot.slane %v422, %v431
        %v433 = vlaneseq
        %v434 = vshrl.u32 %v433, 7
        %v435 = vsub.s32 2, %v434
        %v436 = vrot.slane %v426, %v435
        %439 = vrot.lane.b32.xlu0 %v432, 113
        %v440 = vpop.permute.xlu0 %439
        %441 = vrot.lane.b32.xlu0 %v436, 113
        %v442 = vpop.permute.xlu0 %441
        %vm443 = vcmask 924672
        %v444 = vsel %vm443, %v440, %v442
        %v448 = vmul.f32 %v416, %v440
        %v449 = vmul.f32 %v417, %v444
        %v450 = vmul.f32 %v418, %v442
        %454 = vrot.lane.b32.xlu0 %v448, 15
        %v455 = vpop.permute.xlu0 %454
        %456 = vrot.lane.b32.xlu0 %v449, 15
        %v457 = vpop.permute.xlu0 %456
        %458 = vrot.lane.b32.xlu0 %v450, 15
        %v459 = vpop.permute.xlu0 %458
        %vm460 = vcmask 121856
        %v461 = vsel %vm460, %v455, %v457
        %v462 = vsel %vm460, %v457, %v459
        %465 = vst [vmem:[#allocation3 + $0x20] sm:$0xf] %v461
        %466 = vst [vmem:[#allocation3 + $0x28] sm:$0xf] %v462
        %v467 = vld [vmem:[#allocation2] sm:$0xf]
        %v468 = vld [vmem:[#allocation2 + $0x8] sm:$0xf]
        %v469 = vld [vmem:[#allocation2 + $0x10] sm:$0xf]
        %470 = vrot.lane.b32.xlu0 %v362, 127
        %v471 = vpop.permute.xlu0 %470
        %472 = vrot.lane.b32.xlu0 %v366, 127
        %v473 = vpop.permute.xlu0 %472
        %vm474 = vcmask 1039360
        %v475 = vsel %vm474, %v471, %v473
        %v479 = vmul.f32 %v467, %v471
        %v480 = vmul.f32 %v468, %v475
        %v481 = vmul.f32 %v469, %v473
        %485 = vrot.lane.b32.xlu0 %v479, 1
        %v486 = vpop.permute.xlu0 %485
        %487 = vrot.lane.b32.xlu0 %v480, 1
        %v488 = vpop.permute.xlu0 %487
        %489 = vrot.lane.b32.xlu0 %v481, 1
        %v490 = vpop.permute.xlu0 %489
        %vm491 = vcmask 7168
        %v492 = vsel %vm491, %v486, %v488
        %v493 = vsel %vm491, %v488, %v490
        %496 = vst [vmem:[#allocation3 + $0x30] sm:$0xf] %v492
        %497 = vst [vmem:[#allocation3 + $0x38] sm:$0xf] %v493
        %v498 = vld [vmem:[#allocation2 + $0x8] sm:$0xf]
        %v499 = vld [vmem:[#allocation2 + $0x10] sm:$0xf]
        %500 = vst [vmem:[#allocation3 + $0x40] sm:$0xf] %v498
        %501 = vst [vmem:[#allocation3 + $0x48] sm:$0xf] %v499
        %v502 = vld [vmem:[#allocation2 + $0x8] sm:$0xf]
        %v503 = vld [vmem:[#allocation2 + $0x10] sm:$0xf]
        %v504 = vld [vmem:[#allocation2 + $0x18] sm:$0xf]
        %505 = vrot.lane.b32.xlu0 %v432, 1
        %v506 = vpop.permute.xlu0 %505
        %507 = vrot.lane.b32.xlu0 %v436, 1
        %v508 = vpop.permute.xlu0 %507
        %v509 = vsel %vm491, %v506, %v508
        %v513 = vmul.f32 %v502, %v506
        %v514 = vmul.f32 %v503, %v509
        %v515 = vmul.f32 %v504, %v508
        %519 = vrot.lane.b32.xlu0 %v513, 127
        %v520 = vpop.permute.xlu0 %519
        %521 = vrot.lane.b32.xlu0 %v514, 127
        %v522 = vpop.permute.xlu0 %521
        %523 = vrot.lane.b32.xlu0 %v515, 127
        %v524 = vpop.permute.xlu0 %523
        %v525 = vsel %vm474, %v520, %v522
        %v526 = vsel %vm474, %v522, %v524
        %529 = vst [vmem:[#allocation3 + $0x50] sm:$0xf] %v525
        %530 = vst [vmem:[#allocation3 + $0x58] sm:$0xf] %v526
        %v531 = vld [vmem:[#allocation2 + $0x8] sm:$0xf]
        %v532 = vld [vmem:[#allocation2 + $0x10] sm:$0xf]
        %v533 = vld [vmem:[#allocation2 + $0x18] sm:$0xf]
        %534 = vrot.lane.b32.xlu0 %v362, 15
        %v535 = vpop.permute.xlu0 %534
        %536 = vrot.lane.b32.xlu0 %v366, 15
        %v537 = vpop.permute.xlu0 %536
        %v538 = vsel %vm460, %v535, %v537
        %v542 = vmul.f32 %v531, %v535
        %v543 = vmul.f32 %v532, %v538
        %v544 = vmul.f32 %v533, %v537
        %548 = vrot.lane.b32.xlu0 %v542, 113
        %v549 = vpop.permute.xlu0 %548
        %550 = vrot.lane.b32.xlu0 %v543, 113
        %v551 = vpop.permute.xlu0 %550
        %552 = vrot.lane.b32.xlu0 %v544, 113
        %v553 = vpop.permute.xlu0 %552
        %v554 = vsel %vm443, %v549, %v551
        %v555 = vsel %vm443, %v551, %v553
        %558 = vst [vmem:[#allocation3 + $0x60] sm:$0xf] %v554
        %559 = vst [vmem:[#allocation3 + $0x68] sm:$0xf] %v555
        %v560 = vld [vmem:[#allocation2 + $0x8] sm:$0xf]
        %v561 = vld [vmem:[#allocation2 + $0x10] sm:$0xf]
        %v562 = vld [vmem:[#allocation2 + $0x18] sm:$0xf]
        %566 = vrot.lane.b32.xlu0 %v560, 112
        %v567 = vpop.permute.xlu0 %566
        %568 = vrot.lane.b32.xlu0 %v561, 112
        %v569 = vpop.permute.xlu0 %568
        %570 = vrot.lane.b32.xlu0 %v562, 112
        %v571 = vpop.permute.xlu0 %570
        %vm572 = vcmask 916480
        %v573 = vsel %vm572, %v567, %v569
        %v574 = vsel %vm572, %v569, %v571
        %577 = vst [vmem:[#allocation3 + $0x70] sm:$0xf] %v573
        %578 = vst [vmem:[#allocation3 + $0x78] sm:$0xf] %v574
        %v579 = vld [vmem:[#allocation2 + $0x8] sm:$0xf]
        %v580 = vld [vmem:[#allocation2 + $0x10] sm:$0xf]
        %v581 = vld [vmem:[#allocation2 + $0x18] sm:$0xf]
        %582 = vrot.lane.b32.xlu0 %v432, 17
        %v583 = vpop.permute.xlu0 %582
        %584 = vrot.lane.b32.xlu0 %v436, 17
        %v585 = vpop.permute.xlu0 %584
        %v586 = vsel %vm390, %v583, %v585
        %v590 = vmul.f32 %v579, %v583
        %v591 = vmul.f32 %v580, %v586
        %v592 = vmul.f32 %v581, %v585
        %596 = vrot.lane.b32.xlu0 %v590, 111
        %v597 = vpop.permute.xlu0 %596
        %598 = vrot.lane.b32.xlu0 %v591, 111
        %v599 = vpop.permute.xlu0 %598
        %600 = vrot.lane.b32.xlu0 %v592, 111
        %v601 = vpop.permute.xlu0 %600
        %v602 = vsel %vm373, %v597, %v599
        %v603 = vsel %vm373, %v599, %v601
        %606 = vst [vmem:[#allocation3 + $0x80] sm:$0xf] %v602
        %607 = vst [vmem:[#allocation3 + $0x88] sm:$0xf] %v603
        %v608 = vld [vmem:[#allocation3] sm:$0xff]
        %v609 = vld [vmem:[#allocation3 + $0x8] sm:$0xff]
        %v610 = vld [vmem:[#allocation3 + $0x10] sm:$0xff]
        %v611 = vld [vmem:[#allocation3 + $0x18] sm:$0xff]
        %v612 = vld [vmem:[#allocation3 + $0x20] sm:$0xff]
        %v613 = vld [vmem:[#allocation3 + $0x28] sm:$0xff]
        %v614 = vld [vmem:[#allocation3 + $0x30] sm:$0xff]
        %v615 = vld [vmem:[#allocation3 + $0x38] sm:$0xff]
        %v616 = vld [vmem:[#allocation3 + $0x40] sm:$0xff]
        %v617 = vld [vmem:[#allocation3 + $0x48] sm:$0xff]
        %v618 = vld [vmem:[#allocation3 + $0x50] sm:$0xff]
        %v619 = vld [vmem:[#allocation3 + $0x58] sm:$0xff]
        %v620 = vld [vmem:[#allocation3 + $0x60] sm:$0xff]
        %v621 = vld [vmem:[#allocation3 + $0x68] sm:$0xff]
        %v622 = vld [vmem:[#allocation3 + $0x70] sm:$0xff]
        %v623 = vld [vmem:[#allocation3 + $0x78] sm:$0xff]
        %v624 = vld [vmem:[#allocation3 + $0x80] sm:$0xff]
        %v625 = vld [vmem:[#allocation3 + $0x88] sm:$0xff]
        %627 = vset.pattern.permute.xlu0 0
        %628 = vperm.xlu0 %627, %v270
        %v629 = vpop.permute.xlu0 %628
        %vm631 = vcmask 588800
        %v633 = vsel %vm631, %v272, 0
        %635 = vmatprep.subr.mxu0 %v609
        %636 = vmatpush1.msra.mxu0 %v608
        %637 = vmatprep.subr.mxu0 %v611
        %638 = vmatpush1.msra.mxu0 %v610
        %639 = vmatprep.subr.mxu0 %v613
        %640 = vmatpush1.msra.mxu0 %v612
        %641 = vmatprep.subr.mxu0 %v615
        %642 = vmatpush1.msra.mxu0 %v614
        %643 = vmatprep.subr.mxu0 %v617
        %644 = vmatpush1.msra.mxu0 %v616
        %645 = vmatprep.subr.mxu0 %v619
        %646 = vmatpush1.msra.mxu0 %v618
        %647 = vmatprep.subr.mxu0 %v621
        %648 = vmatpush1.msra.mxu0 %v620
        %649 = vmatprep.subr.mxu0 %v623
        %650 = vmatpush1.msra.mxu0 %v622
        %651 = vmatprep.subr.mxu0 %v625
        %652 = vmatpush1.msra.mxu0 %v624
        %653 = vmatprep.subr.mxu0 0.0
        %654 = vmatpush1.msra.mxu0 0.0
        %655 = vmatprep.subr.mxu0 0.0
        %656 = vmatpush1.msra.mxu0 0.0
        %657 = vmatprep.subr.mxu0 0.0
        %658 = vmatpush1.msra.mxu0 0.0
        %659 = vmatprep.subr.mxu0 0.0
        %660 = vmatpush1.msra.mxu0 0.0
        %661 = vmatprep.subr.mxu0 0.0
        %662 = vmatpush1.msra.mxu0 0.0
        %663 = vmatprep.subr.mxu0 0.0
        %664 = vmatpush1.msra.mxu0 0.0
        %665 = vmatprep.subr.mxu0 0.0
        %666 = vmatpush1.msra.mxu0 0.0
        %667 = vmatprep.subr.mxu0 0.0
        %668 = vmatpush1.msra.mxu0 0.0
        %669 = vmatprep.subr.mxu0 0.0
        %670 = vmatpush1.msra.mxu0 0.0
        %671 = vmatprep.subr.mxu0 0.0
        %672 = vmatpush1.msra.mxu0 0.0
        %673 = vmatprep.subr.mxu0 0.0
        %674 = vmatpush1.msra.mxu0 0.0
        %675 = vmatprep.subr.mxu0 0.0
        %676 = vmatpush1.msra.mxu0 0.0
        %677 = vmatprep.subr.mxu0 0.0
        %678 = vmatpush1.msra.mxu0 0.0
        %679 = vmatprep.subr.mxu0 0.0
        %680 = vmatpush1.msra.mxu0 0.0
        %681 = vmatprep.subr.mxu0 0.0
        %682 = vmatpush1.msra.mxu0 0.0
        %683 = vmatprep.subr.mxu0 0.0
        %684 = vmatpush1.msra.mxu0 0.0
        %685 = vmatprep.subr.mxu0 0.0
        %686 = vmatpush1.msra.mxu0 0.0
        %687 = vmatprep.subr.mxu0 0.0
        %688 = vmatpush1.msra.mxu0 0.0
        %689 = vmatprep.subr.mxu0 0.0
        %690 = vmatpush1.msra.mxu0 0.0
        %691 = vmatprep.subr.mxu0 0.0
        %692 = vmatpush1.msra.mxu0 0.0
        %693 = vmatprep.subr.mxu0 0.0
        %694 = vmatpush1.msra.mxu0 0.0
        %695 = vmatprep.subr.mxu0 0.0
        %696 = vmatpush1.msra.mxu0 0.0
        %697 = vmatprep.subr.mxu0 0.0
        %698 = vmatpush1.msra.mxu0 0.0
        %699 = vmatprep.mubr.f32.mxu0 0.0
        %700 = vmatmul.mubr.f32.gmra.mrb[0].mxu0 %v633
        %v701 = vpop.f32.mrb[0].mxu0
        %v702 = vadd.f32 %v629, %v701
        %v703 = vpop.f32.mrb[0].mxu0
        %v704 = vadd.f32 %v629, %v703
        %705 = vdwg.mxu0
        %v707 = vcombine.high %v264, %v264
        %v709 = vadd.f32 %v702, %v264
        %v710 = vadd.f32 %v704, %v707
        %v711 = vmul.f32 %v709, 0.5
        %v712 = vmul.f32 %v710, 0.5
        %v713 = vsel %vm279, %v711, 0.0
        %v714 = vsel %vm279, %v712, 0.0
        %v715 = vadd.f32 %v713, %v714
        %716 = vadd.xlane.f32.xlu0 %v715
        %v717 = vpop.xlane.xlu0 %716
        %v718 = vrot.slane %v717, 4
        %v719 = vadd.f32 %v717, %v718
        %v720 = vrot.slane %v719, 2
        %v721 = vadd.f32 %v719, %v720
        %v722 = vrot.slane %v721, 1
        %v723 = vadd.f32 %v721, %v722
        %s724 = vtos %v723
        %s725 = smul.f32 %s724, 0.0009765625
        %v726 = vstv %s725
        %v727 = vsub.f32 %v711, %v726
        %v728 = vsub.f32 %v712, %v726
        %v729 = vmul.f32 %v727, %v727
        %v730 = vmul.f32 %v728, %v728
        %v731 = vsel %vm279, %v729, 0.0
        %v732 = vsel %vm279, %v730, 0.0
        %v733 = vadd.f32 %v731, %v732
        %734 = vadd.xlane.f32.xlu0 %v733
        %v735 = vpop.xlane.xlu0 %734
        %v736 = vrot.slane %v735, 4
        %v737 = vadd.f32 %v735, %v736
        %v738 = vrot.slane %v737, 2
        %v739 = vadd.f32 %v737, %v738
        %v740 = vrot.slane %v739, 1
        %v741 = vadd.f32 %v739, %v740
        %s742 = vtos %v741
        %s743 = smul.f32 %s742, 0.0009765625
        %s744 = sadd.f32 %s743, 1e-05
        %v745 = vstv %s744
        %v746 = vrsqrt.pop %v745
        %s747 = vtos %v746
        %v748 = vstv %s747
        %v749 = vmul.f32 %v727, %v748
        %v750 = vmul.f32 %v728, %v748
        %752 = vset.pattern.permute.xlu0 0
        %753 = vperm.xlu0 %752, %v267
        %v754 = vpop.permute.xlu0 %753
        %v756 = vmul.f32 %v749, %v754
        %v757 = vmul.f32 %v750, %v754
        %v758 = vrot.slane %v754, 4
        %v760 = vadd.f32 %v756, %v758
        %v761 = vadd.f32 %v757, %v758
        %762 = vst [vmem:[#allocation2 + $0x8] sm:$0xf] %v760
        %763 = vst [vmem:[#allocation2 + $0x10] sm:$0xf] %v761
        %v764 = vld [vmem:[#allocation2] sm:$0xf]
        %v765 = vld [vmem:[#allocation2 + $0x8] sm:$0xf]
        %v766 = vld [vmem:[#allocation2 + $0x10] sm:$0xf]
        %v767 = vmul.f32 %v764, %v370
        %v768 = vmul.f32 %v765, %v374
        %v769 = vmul.f32 %v766, %v372
        %773 = vrot.lane.b32.xlu0 %v767, 17
        %v774 = vpop.permute.xlu0 %773
        %775 = vrot.lane.b32.xlu0 %v768, 17
        %v776 = vpop.permute.xlu0 %775
        %777 = vrot.lane.b32.xlu0 %v769, 17
        %v778 = vpop.permute.xlu0 %777
        %v779 = vsel %vm390, %v774, %v776
        %v780 = vsel %vm390, %v776, %v778
        %783 = vst [vmem:[#allocation3] sm:$0xf] %v779
        %784 = vst [vmem:[#allocation3 + $0x8] sm:$0xf] %v780
        %v785 = vld [vmem:[#allocation2] sm:$0xf]
        %v786 = vld [vmem:[#allocation2 + $0x8] sm:$0xf]
        %v787 = vld [vmem:[#allocation2 + $0x10] sm:$0xf]
        %791 = vrot.lane.b32.xlu0 %v785, 16
        %v792 = vpop.permute.xlu0 %791
        %793 = vrot.lane.b32.xlu0 %v786, 16
        %v794 = vpop.permute.xlu0 %793
        %795 = vrot.lane.b32.xlu0 %v787, 16
        %v796 = vpop.permute.xlu0 %795
        %v797 = vsel %vm409, %v792, %v794
        %v798 = vsel %vm409, %v794, %v796
        %801 = vst [vmem:[#allocation3 + $0x10] sm:$0xf] %v797
        %802 = vst [vmem:[#allocation3 + $0x18] sm:$0xf] %v798
        %v803 = vld [vmem:[#allocation2] sm:$0xf]
        %v804 = vld [vmem:[#allocation2 + $0x8] sm:$0xf]
        %v805 = vld [vmem:[#allocation2 + $0x10] sm:$0xf]
        %v806 = vmul.f32 %v803, %v440
        %v807 = vmul.f32 %v804, %v444
        %v808 = vmul.f32 %v805, %v442
        %812 = vrot.lane.b32.xlu0 %v806, 15
        %v813 = vpop.permute.xlu0 %812
        %814 = vrot.lane.b32.xlu0 %v807, 15
        %v815 = vpop.permute.xlu0 %814
        %816 = vrot.lane.b32.xlu0 %v808, 15
        %v817 = vpop.permute.xlu0 %816
        %v818 = vsel %vm460, %v813, %v815
        %v819 = vsel %vm460, %v815, %v817
        %822 = vst [vmem:[#allocation3 + $0x20] sm:$0xf] %v818
        %823 = vst [vmem:[#allocation3 + $0x28] sm:$0xf] %v819
        %v824 = vld [vmem:[#allocation2] sm:$0xf]
        %v825 = vld [vmem:[#allocation2 + $0x8] sm:$0xf]
        %v826 = vld [vmem:[#allocation2 + $0x10] sm:$0xf]
        %v827 = vmul.f32 %v824, %v471
        %v828 = vmul.f32 %v825, %v475
        %v829 = vmul.f32 %v826, %v473
        %833 = vrot.lane.b32.xlu0 %v827, 1
        %v834 = vpop.permute.xlu0 %833
        %835 = vrot.lane.b32.xlu0 %v828, 1
        %v836 = vpop.permute.xlu0 %835
        %837 = vrot.lane.b32.xlu0 %v829, 1
        %v838 = vpop.permute.xlu0 %837
        %v839 = vsel %vm491, %v834, %v836
        %v840 = vsel %vm491, %v836, %v838
        %843 = vst [vmem:[#allocation3 + $0x30] sm:$0xf] %v839
        %844 = vst [vmem:[#allocation3 + $0x38] sm:$0xf] %v840
        %v845 = vld [vmem:[#allocation2 + $0x8] sm:$0xf]
        %v846 = vld [vmem:[#allocation2 + $0x10] sm:$0xf]
        %847 = vst [vmem:[#allocation3 + $0x40] sm:$0xf] %v845
        %848 = vst [vmem:[#allocation3 + $0x48] sm:$0xf] %v846
        %v849 = vld [vmem:[#allocation2 + $0x8] sm:$0xf]
        %v850 = vld [vmem:[#allocation2 + $0x10] sm:$0xf]
        %v851 = vld [vmem:[#allocation2 + $0x18] sm:$0xf]
        %v852 = vmul.f32 %v849, %v506
        %v853 = vmul.f32 %v850, %v509
        %v854 = vmul.f32 %v851, %v508
        %858 = vrot.lane.b32.xlu0 %v852, 127
        %v859 = vpop.permute.xlu0 %858
        %860 = vrot.lane.b32.xlu0 %v853, 127
        %v861 = vpop.permute.xlu0 %860
        %862 = vrot.lane.b32.xlu0 %v854, 127
        %v863 = vpop.permute.xlu0 %862
        %v864 = vsel %vm474, %v859, %v861
        %v865 = vsel %vm474, %v861, %v863
        %868 = vst [vmem:[#allocation3 + $0x50] sm:$0xf] %v864
        %869 = vst [vmem:[#allocation3 + $0x58] sm:$0xf] %v865
        %v870 = vld [vmem:[#allocation2 + $0x8] sm:$0xf]
        %v871 = vld [vmem:[#allocation2 + $0x10] sm:$0xf]
        %v872 = vld [vmem:[#allocation2 + $0x18] sm:$0xf]
        %v873 = vmul.f32 %v870, %v535
        %v874 = vmul.f32 %v871, %v538
        %v875 = vmul.f32 %v872, %v537
        %879 = vrot.lane.b32.xlu0 %v873, 113
        %v880 = vpop.permute.xlu0 %879
        %881 = vrot.lane.b32.xlu0 %v874, 113
        %v882 = vpop.permute.xlu0 %881
        %883 = vrot.lane.b32.xlu0 %v875, 113
        %v884 = vpop.permute.xlu0 %883
        %v885 = vsel %vm443, %v880, %v882
        %v886 = vsel %vm443, %v882, %v884
        %889 = vst [vmem:[#allocation3 + $0x60] sm:$0xf] %v885
        %890 = vst [vmem:[#allocation3 + $0x68] sm:$0xf] %v886
        %v891 = vld [vmem:[#allocation2 + $0x8] sm:$0xf]
        %v892 = vld [vmem:[#allocation2 + $0x10] sm:$0xf]
        %v893 = vld [vmem:[#allocation2 + $0x18] sm:$0xf]
        %897 = vrot.lane.b32.xlu0 %v891, 112
        %v898 = vpop.permute.xlu0 %897
        %899 = vrot.lane.b32.xlu0 %v892, 112
        %v900 = vpop.permute.xlu0 %899
        %901 = vrot.lane.b32.xlu0 %v893, 112
        %v902 = vpop.permute.xlu0 %901
        %v903 = vsel %vm572, %v898, %v900
        %v904 = vsel %vm572, %v900, %v902
        %907 = vst [vmem:[#allocation3 + $0x70] sm:$0xf] %v903
        %908 = vst [vmem:[#allocation3 + $0x78] sm:$0xf] %v904
        %v909 = vld [vmem:[#allocation2 + $0x8] sm:$0xf]
        %v910 = vld [vmem:[#allocation2 + $0x10] sm:$0xf]
        %v911 = vld [vmem:[#allocation2 + $0x18] sm:$0xf]
        %v912 = vmul.f32 %v909, %v583
        %v913 = vmul.f32 %v910, %v586
        %v914 = vmul.f32 %v911, %v585
        %918 = vrot.lane.b32.xlu0 %v912, 111
        %v919 = vpop.permute.xlu0 %918
        %920 = vrot.lane.b32.xlu0 %v913, 111
        %v921 = vpop.permute.xlu0 %920
        %922 = vrot.lane.b32.xlu0 %v914, 111
        %v923 = vpop.permute.xlu0 %922
        %v924 = vsel %vm373, %v919, %v921
        %v925 = vsel %vm373, %v921, %v923
        %928 = vst [vmem:[#allocation3 + $0x80] sm:$0xf] %v924
        %929 = vst [vmem:[#allocation3 + $0x88] sm:$0xf] %v925
        %v930 = vld [vmem:[#allocation3] sm:$0xff]
        %v931 = vld [vmem:[#allocation3 + $0x8] sm:$0xff]
        %v932 = vld [vmem:[#allocation3 + $0x10] sm:$0xff]
        %v933 = vld [vmem:[#allocation3 + $0x18] sm:$0xff]
        %v934 = vld [vmem:[#allocation3 + $0x20] sm:$0xff]
        %v935 = vld [vmem:[#allocation3 + $0x28] sm:$0xff]
        %v936 = vld [vmem:[#allocation3 + $0x30] sm:$0xff]
        %v937 = vld [vmem:[#allocation3 + $0x38] sm:$0xff]
        %v938 = vld [vmem:[#allocation3 + $0x40] sm:$0xff]
        %v939 = vld [vmem:[#allocation3 + $0x48] sm:$0xff]
        %v940 = vld [vmem:[#allocation3 + $0x50] sm:$0xff]
        %v941 = vld [vmem:[#allocation3 + $0x58] sm:$0xff]
        %v942 = vld [vmem:[#allocation3 + $0x60] sm:$0xff]
        %v943 = vld [vmem:[#allocation3 + $0x68] sm:$0xff]
        %v944 = vld [vmem:[#allocation3 + $0x70] sm:$0xff]
        %v945 = vld [vmem:[#allocation3 + $0x78] sm:$0xff]
        %v946 = vld [vmem:[#allocation3 + $0x80] sm:$0xff]
        %v947 = vld [vmem:[#allocation3 + $0x88] sm:$0xff]
        %949 = vset.pattern.permute.xlu0 0
        %950 = vperm.xlu0 %949, %v266
        %v951 = vpop.permute.xlu0 %950
        %v953 = vunpack.c.l.s4 839922192
        %v954 = vunpack.c.0.s8 %v953
        %v955 = vlaneseq
        %v956 = vshrl.u32 %v955, 7
        %v957 = vsub.s32 %v954, %v956
        %v958 = vrot.slane %v951, %v957
        %v960 = vmul.f32 %v317, %v958
        %v962 = vunpack.c.l.s4 1985246804
        %v963 = vunpack.c.0.s8 %v962
        %v964 = vlaneseq
        %v965 = vshrl.u32 %v964, 7
        %v966 = vsub.s32 %v963, %v965
        %v967 = vrot.slane %v951, %v966
        %v969 = vadd.f32 %v960, %v967
        %v971 = vcombine.high %v969, %v969
        %973 = vst [vmem:[#allocation2 + $0x8] sm:$0xf] %v969
        %974 = vst [vmem:[#allocation2 + $0x10] sm:$0xf] %v971
        %v975 = vld [vmem:[#allocation2] sm:$0xf]
        %v976 = vld [vmem:[#allocation2 + $0x8] sm:$0xf]
        %v977 = vld [vmem:[#allocation2 + $0x10] sm:$0xf]
        %v978 = vmul.f32 %v975, %v370
        %v979 = vmul.f32 %v976, %v374
        %v980 = vmul.f32 %v977, %v372
        %984 = vrot.lane.b32.xlu0 %v978, 17
        %v985 = vpop.permute.xlu0 %984
        %986 = vrot.lane.b32.xlu0 %v979, 17
        %v987 = vpop.permute.xlu0 %986
        %988 = vrot.lane.b32.xlu0 %v980, 17
        %v989 = vpop.permute.xlu0 %988
        %v990 = vsel %vm390, %v985, %v987
        %v991 = vsel %vm390, %v987, %v989
        %994 = vst [vmem:[#allocation3] sm:$0xf] %v990
        %995 = vst [vmem:[#allocation3 + $0x8] sm:$0xf] %v991
        %v996 = vld [vmem:[#allocation2] sm:$0xf]
        %v997 = vld [vmem:[#allocation2 + $0x8] sm:$0xf]
        %v998 = vld [vmem:[#allocation2 + $0x10] sm:$0xf]
        %1002 = vrot.lane.b32.xlu0 %v996, 16
        %v1003 = vpop.permute.xlu0 %1002
        %1004 = vrot.lane.b32.xlu0 %v997, 16
        %v1005 = vpop.permute.xlu0 %1004
        %1006 = vrot.lane.b32.xlu0 %v998, 16
        %v1007 = vpop.permute.xlu0 %1006
        %v1008 = vsel %vm409, %v1003, %v1005
        %v1009 = vsel %vm409, %v1005, %v1007
        %1012 = vst [vmem:[#allocation3 + $0x10] sm:$0xf] %v1008
        %1013 = vst [vmem:[#allocation3 + $0x18] sm:$0xf] %v1009
        %v1014 = vld [vmem:[#allocation2] sm:$0xf]
        %v1015 = vld [vmem:[#allocation2 + $0x8] sm:$0xf]
        %v1016 = vld [vmem:[#allocation2 + $0x10] sm:$0xf]
        %v1017 = vmul.f32 %v1014, %v440
        %v1018 = vmul.f32 %v1015, %v444
        %v1019 = vmul.f32 %v1016, %v442
        %1023 = vrot.lane.b32.xlu0 %v1017, 15
        %v1024 = vpop.permute.xlu0 %1023
        %1025 = vrot.lane.b32.xlu0 %v1018, 15
        %v1026 = vpop.permute.xlu0 %1025
        %1027 = vrot.lane.b32.xlu0 %v1019, 15
        %v1028 = vpop.permute.xlu0 %1027
        %v1029 = vsel %vm460, %v1024, %v1026
        %v1030 = vsel %vm460, %v1026, %v1028
        %1033 = vst [vmem:[#allocation3 + $0x20] sm:$0xf] %v1029
        %1034 = vst [vmem:[#allocation3 + $0x28] sm:$0xf] %v1030
        %v1035 = vld [vmem:[#allocation2] sm:$0xf]
        %v1036 = vld [vmem:[#allocation2 + $0x8] sm:$0xf]
        %v1037 = vld [vmem:[#allocation2 + $0x10] sm:$0xf]
        %v1038 = vmul.f32 %v1035, %v471
        %v1039 = vmul.f32 %v1036, %v475
        %v1040 = vmul.f32 %v1037, %v473
        %1044 = vrot.lane.b32.xlu0 %v1038, 1
        %v1045 = vpop.permute.xlu0 %1044
        %1046 = vrot.lane.b32.xlu0 %v1039, 1
        %v1047 = vpop.permute.xlu0 %1046
        %1048 = vrot.lane.b32.xlu0 %v1040, 1
        %v1049 = vpop.permute.xlu0 %1048
        %v1050 = vsel %vm491, %v1045, %v1047
        %v1051 = vsel %vm491, %v1047, %v1049
        %1054 = vst [vmem:[#allocation3 + $0x30] sm:$0xf] %v1050
        %1055 = vst [vmem:[#allocation3 + $0x38] sm:$0xf] %v1051
        %v1056 = vld [vmem:[#allocation2 + $0x8] sm:$0xf]
        %v1057 = vld [vmem:[#allocation2 + $0x10] sm:$0xf]
        %1058 = vst [vmem:[#allocation3 + $0x40] sm:$0xf] %v1056
        %1059 = vst [vmem:[#allocation3 + $0x48] sm:$0xf] %v1057
        %v1060 = vld [vmem:[#allocation2 + $0x8] sm:$0xf]
        %v1061 = vld [vmem:[#allocation2 + $0x10] sm:$0xf]
        %v1062 = vld [vmem:[#allocation2 + $0x18] sm:$0xf]
        %v1063 = vmul.f32 %v1060, %v506
        %v1064 = vmul.f32 %v1061, %v509
        %v1065 = vmul.f32 %v1062, %v508
        %1069 = vrot.lane.b32.xlu0 %v1063, 127
        %v1070 = vpop.permute.xlu0 %1069
        %1071 = vrot.lane.b32.xlu0 %v1064, 127
        %v1072 = vpop.permute.xlu0 %1071
        %1073 = vrot.lane.b32.xlu0 %v1065, 127
        %v1074 = vpop.permute.xlu0 %1073
        %v1075 = vsel %vm474, %v1070, %v1072
        %v1076 = vsel %vm474, %v1072, %v1074
        %1079 = vst [vmem:[#allocation3 + $0x50] sm:$0xf] %v1075
        %1080 = vst [vmem:[#allocation3 + $0x58] sm:$0xf] %v1076
        %v1081 = vld [vmem:[#allocation2 + $0x8] sm:$0xf]
        %v1082 = vld [vmem:[#allocation2 + $0x10] sm:$0xf]
        %v1083 = vld [vmem:[#allocation2 + $0x18] sm:$0xf]
        %v1084 = vmul.f32 %v1081, %v535
        %v1085 = vmul.f32 %v1082, %v538
        %v1086 = vmul.f32 %v1083, %v537
        %1090 = vrot.lane.b32.xlu0 %v1084, 113
        %v1091 = vpop.permute.xlu0 %1090
        %1092 = vrot.lane.b32.xlu0 %v1085, 113
        %v1093 = vpop.permute.xlu0 %1092
        %1094 = vrot.lane.b32.xlu0 %v1086, 113
        %v1095 = vpop.permute.xlu0 %1094
        %v1096 = vsel %vm443, %v1091, %v1093
        %v1097 = vsel %vm443, %v1093, %v1095
        %1100 = vst [vmem:[#allocation3 + $0x60] sm:$0xf] %v1096
        %1101 = vst [vmem:[#allocation3 + $0x68] sm:$0xf] %v1097
        %v1102 = vld [vmem:[#allocation2 + $0x8] sm:$0xf]
        %v1103 = vld [vmem:[#allocation2 + $0x10] sm:$0xf]
        %v1104 = vld [vmem:[#allocation2 + $0x18] sm:$0xf]
        %1108 = vrot.lane.b32.xlu0 %v1102, 112
        %v1109 = vpop.permute.xlu0 %1108
        %1110 = vrot.lane.b32.xlu0 %v1103, 112
        %v1111 = vpop.permute.xlu0 %1110
        %1112 = vrot.lane.b32.xlu0 %v1104, 112
        %v1113 = vpop.permute.xlu0 %1112
        %v1114 = vsel %vm572, %v1109, %v1111
        %v1115 = vsel %vm572, %v1111, %v1113
        %1118 = vst [vmem:[#allocation3 + $0x70] sm:$0xf] %v1114
        %1119 = vst [vmem:[#allocation3 + $0x78] sm:$0xf] %v1115
        %v1120 = vld [vmem:[#allocation2 + $0x8] sm:$0xf]
        %v1121 = vld [vmem:[#allocation2 + $0x10] sm:$0xf]
        %v1122 = vld [vmem:[#allocation2 + $0x18] sm:$0xf]
        %v1123 = vmul.f32 %v1120, %v583
        %v1124 = vmul.f32 %v1121, %v586
        %v1125 = vmul.f32 %v1122, %v585
        %1129 = vrot.lane.b32.xlu0 %v1123, 111
        %v1130 = vpop.permute.xlu0 %1129
        %1131 = vrot.lane.b32.xlu0 %v1124, 111
        %v1132 = vpop.permute.xlu0 %1131
        %1133 = vrot.lane.b32.xlu0 %v1125, 111
        %v1134 = vpop.permute.xlu0 %1133
        %v1135 = vsel %vm373, %v1130, %v1132
        %v1136 = vsel %vm373, %v1132, %v1134
        %1139 = vst [vmem:[#allocation3 + $0x80] sm:$0xf] %v1135
        %1140 = vst [vmem:[#allocation3 + $0x88] sm:$0xf] %v1136
        %v1141 = vld [vmem:[#allocation3] sm:$0xff]
        %v1142 = vld [vmem:[#allocation3 + $0x8] sm:$0xff]
        %v1143 = vld [vmem:[#allocation3 + $0x10] sm:$0xff]
        %v1144 = vld [vmem:[#allocation3 + $0x18] sm:$0xff]
        %v1145 = vld [vmem:[#allocation3 + $0x20] sm:$0xff]
        %v1146 = vld [vmem:[#allocation3 + $0x28] sm:$0xff]
        %v1147 = vld [vmem:[#allocation3 + $0x30] sm:$0xff]
        %v1148 = vld [vmem:[#allocation3 + $0x38] sm:$0xff]
        %v1149 = vld [vmem:[#allocation3 + $0x40] sm:$0xff]
        %v1150 = vld [vmem:[#allocation3 + $0x48] sm:$0xff]
        %v1151 = vld [vmem:[#allocation3 + $0x50] sm:$0xff]
        %v1152 = vld [vmem:[#allocation3 + $0x58] sm:$0xff]
        %v1153 = vld [vmem:[#allocation3 + $0x60] sm:$0xff]
        %v1154 = vld [vmem:[#allocation3 + $0x68] sm:$0xff]
        %v1155 = vld [vmem:[#allocation3 + $0x70] sm:$0xff]
        %v1156 = vld [vmem:[#allocation3 + $0x78] sm:$0xff]
        %v1157 = vld [vmem:[#allocation3 + $0x80] sm:$0xff]
        %v1158 = vld [vmem:[#allocation3 + $0x88] sm:$0xff]
        %1160 = vset.pattern.permute.xlu0 0
        %1161 = vperm.xlu0 %1160, %v271
        %v1162 = vpop.permute.xlu0 %1161
        %v1164 = vrot.slane %v272, 4
        %v1165 = vrot.slane %v273, 4
        %v1166 = vsel %vm279, %v1164, %v1165
        %v1167 = vrot.slane %v629, 4
        %v1168 = vrot.slane %v1162, 4
        %v1169 = vsel %vm279, %v1167, %v1168
        %v1171 = vsel %vm631, %v1166, 0
        %1173 = vmatprep.subr.mxu0 %v1142
        %1174 = vmatpush1.msra.mxu0 %v1141
        %1175 = vmatprep.subr.mxu0 %v1144
        %1176 = vmatpush1.msra.mxu0 %v1143
        %1177 = vmatprep.subr.mxu0 %v1146
        %1178 = vmatpush1.msra.mxu0 %v1145
        %1179 = vmatprep.subr.mxu0 %v1148
        %1180 = vmatpush1.msra.mxu0 %v1147
        %1181 = vmatprep.subr.mxu0 %v1150
        %1182 = vmatpush1.msra.mxu0 %v1149
        %1183 = vmatprep.subr.mxu0 %v1152
        %1184 = vmatpush1.msra.mxu0 %v1151
        %1185 = vmatprep.subr.mxu0 %v1154
        %1186 = vmatpush1.msra.mxu0 %v1153
        %1187 = vmatprep.subr.mxu0 %v1156
        %1188 = vmatpush1.msra.mxu0 %v1155
        %1189 = vmatprep.subr.mxu0 %v1158
        %1190 = vmatpush1.msra.mxu0 %v1157
        %1191 = vmatprep.subr.mxu0 0.0
        %1192 = vmatpush1.msra.mxu0 0.0
        %1193 = vmatprep.subr.mxu0 0.0
        %1194 = vmatpush1.msra.mxu0 0.0
        %1195 = vmatprep.subr.mxu0 0.0
        %1196 = vmatpush1.msra.mxu0 0.0
        %1197 = vmatprep.subr.mxu0 0.0
        %1198 = vmatpush1.msra.mxu0 0.0
        %1199 = vmatprep.subr.mxu0 0.0
        %1200 = vmatpush1.msra.mxu0 0.0
        %1201 = vmatprep.subr.mxu0 0.0
        %1202 = vmatpush1.msra.mxu0 0.0
        %1203 = vmatprep.subr.mxu0 0.0
        %1204 = vmatpush1.msra.mxu0 0.0
        %1205 = vmatprep.subr.mxu0 0.0
        %1206 = vmatpush1.msra.mxu0 0.0
        %1207 = vmatprep.subr.mxu0 0.0
        %1208 = vmatpush1.msra.mxu0 0.0
        %1209 = vmatprep.subr.mxu0 0.0
        %1210 = vmatpush1.msra.mxu0 0.0
        %1211 = vmatprep.subr.mxu0 0.0
        %1212 = vmatpush1.msra.mxu0 0.0
        %1213 = vmatprep.subr.mxu0 0.0
        %1214 = vmatpush1.msra.mxu0 0.0
        %1215 = vmatprep.subr.mxu0 0.0
        %1216 = vmatpush1.msra.mxu0 0.0
        %1217 = vmatprep.subr.mxu0 0.0
        %1218 = vmatpush1.msra.mxu0 0.0
        %1219 = vmatprep.subr.mxu0 0.0
        %1220 = vmatpush1.msra.mxu0 0.0
        %1221 = vmatprep.subr.mxu0 0.0
        %1222 = vmatpush1.msra.mxu0 0.0
        %1223 = vmatprep.subr.mxu0 0.0
        %1224 = vmatpush1.msra.mxu0 0.0
        %1225 = vmatprep.subr.mxu0 0.0
        %1226 = vmatpush1.msra.mxu0 0.0
        %1227 = vmatprep.subr.mxu0 0.0
        %1228 = vmatpush1.msra.mxu0 0.0
        %1229 = vmatprep.subr.mxu0 0.0
        %1230 = vmatpush1.msra.mxu0 0.0
        %1231 = vmatprep.subr.mxu0 0.0
        %1232 = vmatpush1.msra.mxu0 0.0
        %1233 = vmatprep.subr.mxu0 0.0
        %1234 = vmatpush1.msra.mxu0 0.0
        %1235 = vmatprep.subr.mxu0 0.0
        %1236 = vmatpush1.msra.mxu0 0.0
        %1237 = vmatprep.mubr.f32.mxu0 0.0
        %1238 = vmatmul.mubr.f32.gmra.mrb[0].mxu0 %v1171
        %v1239 = vpop.f32.mrb[0].mxu0
        %v1240 = vadd.f32 %v1169, %v1239
        %v1241 = vpop.f32.mrb[0].mxu0
        %v1242 = vadd.f32 %v1169, %v1241
        %1243 = vdwg.mxu0
        %v1244 = vmax.f32 %v1240, -1.0
        %v1245 = vmax.f32 %v1242, -1.0
        %v1246 = vmin.f32 %v1244, 1.0
        %v1247 = vmin.f32 %v1245, 1.0
        %v1248 = vsub.f32 %v1240, %v1246
        %v1249 = vsub.f32 %v1242, %v1247
        %v1250 = vadd.f32 %v1248, %v1249
        %1251 = vadd.xlane.f32.xlu0 %v1250
        %v1252 = vpop.xlane.xlu0 %1251
        %v1253 = vrot.slane %v1252, 4
        %v1254 = vadd.f32 %v1252, %v1253
        %v1255 = vrot.slane %v1254, 2
        %v1256 = vadd.f32 %v1254, %v1255
        %v1257 = vrot.slane %v1256, 1
        %v1258 = vadd.f32 %v1256, %v1257
        %s1259 = vtos %v1258
        %s1260 = smul.f32 %s1259, 0.00048828125
        %v1261 = vstv %s1260
        %v1262 = vsub.f32 %v1248, %v1261
        %v1263 = vsub.f32 %v1249, %v1261
        %v1264 = vmul.f32 %v1262, %v1262
        %v1265 = vmul.f32 %v1263, %v1263
        %v1266 = vadd.f32 %v1264, %v1265
        %1267 = vadd.xlane.f32.xlu0 %v1266
        %v1268 = vpop.xlane.xlu0 %1267
        %v1269 = vrot.slane %v1268, 4
        %v1270 = vadd.f32 %v1268, %v1269
        %v1271 = vrot.slane %v1270, 2
        %v1272 = vadd.f32 %v1270, %v1271
        %v1273 = vrot.slane %v1272, 1
        %v1274 = vadd.f32 %v1272, %v1273
        %s1275 = vtos %v1274
        %s1276 = smul.f32 %s1275, 0.00048828125
        %s1277 = sadd.f32 %s1276, 1e-05
        %v1278 = vstv %s1277
        %v1279 = vrsqrt.pop %v1278
        %s1280 = vtos %v1279
        %v1281 = vstv %s1280
        %v1282 = vmul.f32 %v1262, %v1281
        %v1283 = vmul.f32 %v1263, %v1281
        %1285 = vset.pattern.permute.xlu0 0
        %1286 = vperm.xlu0 %1285, %v268
        %v1287 = vpop.permute.xlu0 %1286
        %v1289 = vmul.f32 %v1282, %v1287
        %v1290 = vmul.f32 %v1283, %v1287
        %1292 = vset.pattern.permute.xlu0 0
        %1293 = vperm.xlu0 %1292, %v269
        %v1294 = vpop.permute.xlu0 %1293
        %v1296 = vadd.f32 %v1289, %v1294
        %v1297 = vadd.f32 %v1290, %v1294
        %1298 = vst [vmem:[#allocation2 + $0x8] sm:$0xff] %v1296
        %1299 = vst [vmem:[#allocation2 + $0x10] sm:$0xff] %v1297
        %v1300 = vld [vmem:[#allocation2] sm:$0xff]
        %v1301 = vld [vmem:[#allocation2 + $0x8] sm:$0xff]
        %v1302 = vld [vmem:[#allocation2 + $0x10] sm:$0xff]
        %v1303 = vmul.f32 %v1300, %v370
        %v1304 = vmul.f32 %v1301, %v374
        %v1305 = vmul.f32 %v1302, %v372
        %1309 = vrot.lane.b32.xlu0 %v1303, 17
        %v1310 = vpop.permute.xlu0 %1309
        %1311 = vrot.lane.b32.xlu0 %v1304, 17
        %v1312 = vpop.permute.xlu0 %1311
        %1313 = vrot.lane.b32.xlu0 %v1305, 17
        %v1314 = vpop.permute.xlu0 %1313
        %v1315 = vsel %vm390, %v1310, %v1312
        %v1316 = vsel %vm390, %v1312, %v1314
        %1319 = vst [vmem:[#allocation3] sm:$0xff] %v1315
        %1320 = vst [vmem:[#allocation3 + $0x8] sm:$0xff] %v1316
        %v1321 = vld [vmem:[#allocation2] sm:$0xff]
        %v1322 = vld [vmem:[#allocation2 + $0x8] sm:$0xff]
        %v1323 = vld [vmem:[#allocation2 + $0x10] sm:$0xff]
        %1327 = vrot.lane.b32.xlu0 %v1321, 16
        %v1328 = vpop.permute.xlu0 %1327
        %1329 = vrot.lane.b32.xlu0 %v1322, 16
        %v1330 = vpop.permute.xlu0 %1329
        %1331 = vrot.lane.b32.xlu0 %v1323, 16
        %v1332 = vpop.permute.xlu0 %1331
        %v1333 = vsel %vm409, %v1328, %v1330
        %v1334 = vsel %vm409, %v1330, %v1332
        %1337 = vst [vmem:[#allocation3 + $0x10] sm:$0xff] %v1333
        %1338 = vst [vmem:[#allocation3 + $0x18] sm:$0xff] %v1334
        %v1339 = vld [vmem:[#allocation2] sm:$0xff]
        %v1340 = vld [vmem:[#allocation2 + $0x8] sm:$0xff]
        %v1341 = vld [vmem:[#allocation2 + $0x10] sm:$0xff]
        %v1342 = vmul.f32 %v1339, %v440
        %v1343 = vmul.f32 %v1340, %v444
        %v1344 = vmul.f32 %v1341, %v442
        %1348 = vrot.lane.b32.xlu0 %v1342, 15
        %v1349 = vpop.permute.xlu0 %1348
        %1350 = vrot.lane.b32.xlu0 %v1343, 15
        %v1351 = vpop.permute.xlu0 %1350
        %1352 = vrot.lane.b32.xlu0 %v1344, 15
        %v1353 = vpop.permute.xlu0 %1352
        %v1354 = vsel %vm460, %v1349, %v1351
        %v1355 = vsel %vm460, %v1351, %v1353
        %1358 = vst [vmem:[#allocation3 + $0x20] sm:$0xff] %v1354
        %1359 = vst [vmem:[#allocation3 + $0x28] sm:$0xff] %v1355
        %v1360 = vld [vmem:[#allocation2] sm:$0xff]
        %v1361 = vld [vmem:[#allocation2 + $0x8] sm:$0xff]
        %v1362 = vld [vmem:[#allocation2 + $0x10] sm:$0xff]
        %v1363 = vmul.f32 %v1360, %v471
        %v1364 = vmul.f32 %v1361, %v475
        %v1365 = vmul.f32 %v1362, %v473
        %1369 = vrot.lane.b32.xlu0 %v1363, 1
        %v1370 = vpop.permute.xlu0 %1369
        %1371 = vrot.lane.b32.xlu0 %v1364, 1
        %v1372 = vpop.permute.xlu0 %1371
        %1373 = vrot.lane.b32.xlu0 %v1365, 1
        %v1374 = vpop.permute.xlu0 %1373
        %v1375 = vsel %vm491, %v1370, %v1372
        %v1376 = vsel %vm491, %v1372, %v1374
        %1379 = vst [vmem:[#allocation3 + $0x30] sm:$0xff] %v1375
        %1380 = vst [vmem:[#allocation3 + $0x38] sm:$0xff] %v1376
        %v1381 = vld [vmem:[#allocation2 + $0x8] sm:$0xff]
        %v1382 = vld [vmem:[#allocation2 + $0x10] sm:$0xff]
        %1383 = vst [vmem:[#allocation3 + $0x40] sm:$0xff] %v1381
        %1384 = vst [vmem:[#allocation3 + $0x48] sm:$0xff] %v1382
        %v1385 = vld [vmem:[#allocation2 + $0x8] sm:$0xff]
        %v1386 = vld [vmem:[#allocation2 + $0x10] sm:$0xff]
        %v1387 = vld [vmem:[#allocation2 + $0x18] sm:$0xff]
        %v1388 = vmul.f32 %v1385, %v506
        %v1389 = vmul.f32 %v1386, %v509
        %v1390 = vmul.f32 %v1387, %v508
        %1394 = vrot.lane.b32.xlu0 %v1388, 127
        %v1395 = vpop.permute.xlu0 %1394
        %1396 = vrot.lane.b32.xlu0 %v1389, 127
        %v1397 = vpop.permute.xlu0 %1396
        %1398 = vrot.lane.b32.xlu0 %v1390, 127
        %v1399 = vpop.permute.xlu0 %1398
        %v1400 = vsel %vm474, %v1395, %v1397
        %v1401 = vsel %vm474, %v1397, %v1399
        %1404 = vst [vmem:[#allocation3 + $0x50] sm:$0xff] %v1400
        %1405 = vst [vmem:[#allocation3 + $0x58] sm:$0xff] %v1401
        %v1406 = vld [vmem:[#allocation2 + $0x8] sm:$0xff]
        %v1407 = vld [vmem:[#allocation2 + $0x10] sm:$0xff]
        %v1408 = vld [vmem:[#allocation2 + $0x18] sm:$0xff]
        %v1409 = vmul.f32 %v1406, %v535
        %v1410 = vmul.f32 %v1407, %v538
        %v1411 = vmul.f32 %v1408, %v537
        %1415 = vrot.lane.b32.xlu0 %v1409, 113
        %v1416 = vpop.permute.xlu0 %1415
        %1417 = vrot.lane.b32.xlu0 %v1410, 113
        %v1418 = vpop.permute.xlu0 %1417
        %1419 = vrot.lane.b32.xlu0 %v1411, 113
        %v1420 = vpop.permute.xlu0 %1419
        %v1421 = vsel %vm443, %v1416, %v1418
        %v1422 = vsel %vm443, %v1418, %v1420
        %1425 = vst [vmem:[#allocation3 + $0x60] sm:$0xff] %v1421
        %1426 = vst [vmem:[#allocation3 + $0x68] sm:$0xff] %v1422
        %v1427 = vld [vmem:[#allocation2 + $0x8] sm:$0xff]
        %v1428 = vld [vmem:[#allocation2 + $0x10] sm:$0xff]
        %v1429 = vld [vmem:[#allocation2 + $0x18] sm:$0xff]
        %1433 = vrot.lane.b32.xlu0 %v1427, 112
        %v1434 = vpop.permute.xlu0 %1433
        %1435 = vrot.lane.b32.xlu0 %v1428, 112
        %v1436 = vpop.permute.xlu0 %1435
        %1437 = vrot.lane.b32.xlu0 %v1429, 112
        %v1438 = vpop.permute.xlu0 %1437
        %v1439 = vsel %vm572, %v1434, %v1436
        %v1440 = vsel %vm572, %v1436, %v1438
        %1443 = vst [vmem:[#allocation3 + $0x70] sm:$0xff] %v1439
        %1444 = vst [vmem:[#allocation3 + $0x78] sm:$0xff] %v1440
        %v1445 = vld [vmem:[#allocation2 + $0x8] sm:$0xff]
        %v1446 = vld [vmem:[#allocation2 + $0x10] sm:$0xff]
        %v1447 = vld [vmem:[#allocation2 + $0x18] sm:$0xff]
        %v1448 = vmul.f32 %v1445, %v583
        %v1449 = vmul.f32 %v1446, %v586
        %v1450 = vmul.f32 %v1447, %v585
        %1454 = vrot.lane.b32.xlu0 %v1448, 111
        %v1455 = vpop.permute.xlu0 %1454
        %1456 = vrot.lane.b32.xlu0 %v1449, 111
        %v1457 = vpop.permute.xlu0 %1456
        %1458 = vrot.lane.b32.xlu0 %v1450, 111
        %v1459 = vpop.permute.xlu0 %1458
        %v1460 = vsel %vm373, %v1455, %v1457
        %v1461 = vsel %vm373, %v1457, %v1459
        %1464 = vst [vmem:[#allocation3 + $0x80] sm:$0xff] %v1460
        %1465 = vst [vmem:[#allocation3 + $0x88] sm:$0xff] %v1461
        %v1466 = vld [vmem:[#allocation3] sm:$0xff]
        %v1467 = vld [vmem:[#allocation3 + $0x8] sm:$0xff]
        %v1468 = vld [vmem:[#allocation3 + $0x10] sm:$0xff]
        %v1469 = vld [vmem:[#allocation3 + $0x18] sm:$0xff]
        %v1470 = vld [vmem:[#allocation3 + $0x20] sm:$0xff]
        %v1471 = vld [vmem:[#allocation3 + $0x28] sm:$0xff]
        %v1472 = vld [vmem:[#allocation3 + $0x30] sm:$0xff]
        %v1473 = vld [vmem:[#allocation3 + $0x38] sm:$0xff]
        %v1474 = vld [vmem:[#allocation3 + $0x40] sm:$0xff]
        %v1475 = vld [vmem:[#allocation3 + $0x48] sm:$0xff]
        %v1476 = vld [vmem:[#allocation3 + $0x50] sm:$0xff]
        %v1477 = vld [vmem:[#allocation3 + $0x58] sm:$0xff]
        %v1478 = vld [vmem:[#allocation3 + $0x60] sm:$0xff]
        %v1479 = vld [vmem:[#allocation3 + $0x68] sm:$0xff]
        %v1480 = vld [vmem:[#allocation3 + $0x70] sm:$0xff]
        %v1481 = vld [vmem:[#allocation3 + $0x78] sm:$0xff]
        %v1482 = vld [vmem:[#allocation3 + $0x80] sm:$0xff]
        %v1483 = vld [vmem:[#allocation3 + $0x88] sm:$0xff]
        %v1485 = vsel %vm631, %v274, 0
        %1487 = vmatprep.subr.mxu0 %v1467
        %1488 = vmatpush1.msra.mxu0 %v1466
        %1489 = vmatprep.subr.mxu0 %v1469
        %1490 = vmatpush1.msra.mxu0 %v1468
        %1491 = vmatprep.subr.mxu0 %v1471
        %1492 = vmatpush1.msra.mxu0 %v1470
        %1493 = vmatprep.subr.mxu0 %v1473
        %1494 = vmatpush1.msra.mxu0 %v1472
        %1495 = vmatprep.subr.mxu0 %v1475
        %1496 = vmatpush1.msra.mxu0 %v1474
        %1497 = vmatprep.subr.mxu0 %v1477
        %1498 = vmatpush1.msra.mxu0 %v1476
        %1499 = vmatprep.subr.mxu0 %v1479
        %1500 = vmatpush1.msra.mxu0 %v1478
        %1501 = vmatprep.subr.mxu0 %v1481
        %1502 = vmatpush1.msra.mxu0 %v1480
        %1503 = vmatprep.subr.mxu0 %v1483
        %1504 = vmatpush1.msra.mxu0 %v1482
        %1505 = vmatprep.subr.mxu0 0.0
        %1506 = vmatpush1.msra.mxu0 0.0
        %1507 = vmatprep.subr.mxu0 0.0
        %1508 = vmatpush1.msra.mxu0 0.0
        %1509 = vmatprep.subr.mxu0 0.0
        %1510 = vmatpush1.msra.mxu0 0.0
        %1511 = vmatprep.subr.mxu0 0.0
        %1512 = vmatpush1.msra.mxu0 0.0
        %1513 = vmatprep.subr.mxu0 0.0
        %1514 = vmatpush1.msra.mxu0 0.0
        %1515 = vmatprep.subr.mxu0 0.0
        %1516 = vmatpush1.msra.mxu0 0.0
        %1517 = vmatprep.subr.mxu0 0.0
        %1518 = vmatpush1.msra.mxu0 0.0
        %1519 = vmatprep.subr.mxu0 0.0
        %1520 = vmatpush1.msra.mxu0 0.0
        %1521 = vmatprep.subr.mxu0 0.0
        %1522 = vmatpush1.msra.mxu0 0.0
        %1523 = vmatprep.subr.mxu0 0.0
        %1524 = vmatpush1.msra.mxu0 0.0
        %1525 = vmatprep.subr.mxu0 0.0
        %1526 = vmatpush1.msra.mxu0 0.0
        %1527 = vmatprep.subr.mxu0 0.0
        %1528 = vmatpush1.msra.mxu0 0.0
        %1529 = vmatprep.subr.mxu0 0.0
        %1530 = vmatpush1.msra.mxu0 0.0
        %1531 = vmatprep.subr.mxu0 0.0
        %1532 = vmatpush1.msra.mxu0 0.0
        %1533 = vmatprep.subr.mxu0 0.0
        %1534 = vmatpush1.msra.mxu0 0.0
        %1535 = vmatprep.subr.mxu0 0.0
        %1536 = vmatpush1.msra.mxu0 0.0
        %1537 = vmatprep.subr.mxu0 0.0
        %1538 = vmatpush1.msra.mxu0 0.0
        %1539 = vmatprep.subr.mxu0 0.0
        %1540 = vmatpush1.msra.mxu0 0.0
        %1541 = vmatprep.subr.mxu0 0.0
        %1542 = vmatpush1.msra.mxu0 0.0
        %1543 = vmatprep.subr.mxu0 0.0
        %1544 = vmatpush1.msra.mxu0 0.0
        %1545 = vmatprep.subr.mxu0 0.0
        %1546 = vmatpush1.msra.mxu0 0.0
        %1547 = vmatprep.subr.mxu0 0.0
        %1548 = vmatpush1.msra.mxu0 0.0
        %1549 = vmatprep.subr.mxu0 0.0
        %1550 = vmatpush1.msra.mxu0 0.0
        %1551 = vmatprep.mubr.f32.mxu0 0.0
        %1552 = vmatmul.mubr.f32.gmra.mrb[0].mxu0 %v1485
        %v1553 = vpop.f32.mrb[0].mxu0
        %v1554 = vadd.f32 0.0, %v1553
        %v1555 = vpop.f32.mrb[0].mxu0
        %v1556 = vadd.f32 0.0, %v1555
        %1557 = vdwg.mxu0
        %v1558 = vsel %vm631, %v1165, 0
        %1560 = vmatprep.subr.mxu0 %v931
        %1561 = vmatpush1.msra.mxu0 %v930
        %1562 = vmatprep.subr.mxu0 %v933
        %1563 = vmatpush1.msra.mxu0 %v932
        %1564 = vmatprep.subr.mxu0 %v935
        %1565 = vmatpush1.msra.mxu0 %v934
        %1566 = vmatprep.subr.mxu0 %v937
        %1567 = vmatpush1.msra.mxu0 %v936
        %1568 = vmatprep.subr.mxu0 %v939
        %1569 = vmatpush1.msra.mxu0 %v938
        %1570 = vmatprep.subr.mxu0 %v941
        %1571 = vmatpush1.msra.mxu0 %v940
        %1572 = vmatprep.subr.mxu0 %v943
        %1573 = vmatpush1.msra.mxu0 %v942
        %1574 = vmatprep.subr.mxu0 %v945
        %1575 = vmatpush1.msra.mxu0 %v944
        %1576 = vmatprep.subr.mxu0 %v947
        %1577 = vmatpush1.msra.mxu0 %v946
        %1578 = vmatprep.subr.mxu0 0.0
        %1579 = vmatpush1.msra.mxu0 0.0
        %1580 = vmatprep.subr.mxu0 0.0
        %1581 = vmatpush1.msra.mxu0 0.0
        %1582 = vmatprep.subr.mxu0 0.0
        %1583 = vmatpush1.msra.mxu0 0.0
        %1584 = vmatprep.subr.mxu0 0.0
        %1585 = vmatpush1.msra.mxu0 0.0
        %1586 = vmatprep.subr.mxu0 0.0
        %1587 = vmatpush1.msra.mxu0 0.0
        %1588 = vmatprep.subr.mxu0 0.0
        %1589 = vmatpush1.msra.mxu0 0.0
        %1590 = vmatprep.subr.mxu0 0.0
        %1591 = vmatpush1.msra.mxu0 0.0
        %1592 = vmatprep.subr.mxu0 0.0
        %1593 = vmatpush1.msra.mxu0 0.0
        %1594 = vmatprep.subr.mxu0 0.0
        %1595 = vmatpush1.msra.mxu0 0.0
        %1596 = vmatprep.subr.mxu0 0.0
        %1597 = vmatpush1.msra.mxu0 0.0
        %1598 = vmatprep.subr.mxu0 0.0
        %1599 = vmatpush1.msra.mxu0 0.0
        %1600 = vmatprep.subr.mxu0 0.0
        %1601 = vmatpush1.msra.mxu0 0.0
        %1602 = vmatprep.subr.mxu0 0.0
        %1603 = vmatpush1.msra.mxu0 0.0
        %1604 = vmatprep.subr.mxu0 0.0
        %1605 = vmatpush1.msra.mxu0 0.0
        %1606 = vmatprep.subr.mxu0 0.0
        %1607 = vmatpush1.msra.mxu0 0.0
        %1608 = vmatprep.subr.mxu0 0.0
        %1609 = vmatpush1.msra.mxu0 0.0
        %1610 = vmatprep.subr.mxu0 0.0
        %1611 = vmatpush1.msra.mxu0 0.0
        %1612 = vmatprep.subr.mxu0 0.0
        %1613 = vmatpush1.msra.mxu0 0.0
        %1614 = vmatprep.subr.mxu0 0.0
        %1615 = vmatpush1.msra.mxu0 0.0
        %1616 = vmatprep.subr.mxu0 0.0
        %1617 = vmatpush1.msra.mxu0 0.0
        %1618 = vmatprep.subr.mxu0 0.0
        %1619 = vmatpush1.msra.mxu0 0.0
        %1620 = vmatprep.subr.mxu0 0.0
        %1621 = vmatpush1.msra.mxu0 0.0
        %1622 = vmatprep.subr.mxu0 0.0
        %1623 = vmatpush1.msra.mxu0 0.0
        %1624 = vmatprep.mubr.f32.mxu0 0.0
        %1625 = vmatmul.mubr.f32.gmra.mrb[0].mxu0 %v1558
        %v1626 = vpop.f32.mrb[0].mxu0
        %v1627 = vadd.f32 %v1554, %v1626
        %v1628 = vpop.f32.mrb[0].mxu0
        %v1629 = vadd.f32 %v1556, %v1628
        %1630 = vdwg.mxu0
        %v1634 = vrot.slane %v1627, 4
        %v1635 = vrot.slane %v1629, 4
        %v1638 = vmul.f32 %v1162, %v1634
        %v1639 = vmul.f32 %v1162, %v1635
        %v1642 = vcombine.high %v1638, %v1639
        %v1644 = vadd.f32 %v263, %v1642
        %1645 = vst [vmem:[%s232] sm:$0xff] %v1644
        %s1646 = sand.u32 %s142, 1
        %s1647 = scalar_lea.sflag [#allocation5], %s1646
        %s1648 = sand.u32 %s142, 1
        %s1649 = smul.addr %s1648, 8
        %s1650 = scalar_lea.vmem [#allocation4], %s1649
        // Predicated region
        $region41: #{tpu_custom_call.1} parent=39 // pred_check
          %p1651 = pneg %p152
        $region42: #{tpu_custom_call.1} parent=39 // pred_check_branch
          %1653 = sbr.rel (%p1651) target = $region44
        $region43: #{tpu_custom_call.1} parent=39 // pred_region
          %s1655 = ssub.s32 128, 128
          %1656 = vsyncadd %s1647, %s1655
          %s1657 = smul.addr %s19, 2
          %s1658 = smul.addr %s1657, 64
          %s1659 = scalar_lea.hbm %s5, %s1658
          %s1661 = sshll.u32 %s1650, 4
          %s1662 = int_to_ptr.vmem [resolvable:$true] %s1661
          %1664 = dma.vmem_to_hbm [thread:$0]  %s1662, 128, %s1659, %s1647
        $region44: #{tpu_custom_call.1} parent=39 // pred_fallthru
          _
      $region40: #{tpu_custom_call.1} parent=5 // pred_fallthru
        _
      %p1665 = scmp.le.s32.totalorder 2, %s14
      // Predicated region
      $region45: #{tpu_custom_call.1} parent=5 // pred_check
        %p1666 = pneg %p1665
      $region46: #{tpu_custom_call.1} parent=5 // pred_check_branch
        %1668 = sbr.rel (%p1666) target = $region48
      $region47: #{tpu_custom_call.1} parent=5 // pred_region
        %s1669 = ssub.s32 %s14, 2
        // Predicated region
        $region49: #{tpu_custom_call.1} parent=47 // pred_check
          %p1670 = pneg %p158
        $region50: #{tpu_custom_call.1} parent=47 // pred_check_branch
          %1672 = sbr.rel (%p1670) target = $region52
        $region51: #{tpu_custom_call.1} parent=47 // pred_region
          %s1673 = sand.u32 %s143, 1
          %s1674 = scalar_lea.sflag [#allocation5], %s1673
          %s1675 = sand.u32 %s143, 1
          %s1676 = smul.addr %s1675, 8
          %s1677 = scalar_lea.vmem [#allocation4], %s1676
          %1678 = dma.done %s1674, 128
        $region52: #{tpu_custom_call.1} parent=47 // pred_fallthru
          _
      $region48: #{tpu_custom_call.1} parent=5 // pred_fallthru
        _
    $region6: #{tpu_custom_call.1} parent=1 // loop_footer
      %s18 = sadd.s32 1, %s14
    $region7: #{tpu_custom_call.1} parent=1 // loop_footer_branch
      %13 = sbr.rel target = $region3
    $region8: #{tpu_custom_call.1} parent=1 // loop_exit
      _
    %1679 = vsyncpa [#allocation5], 1
    %s1680 = scalar_lea.sflag [#allocation5], 1
    %1681 = vsyncpa %s1680, 1

</llo_original>
